<compile_context>
chip_gen: v5e
topology: v5e:2x2
jax: 0.10.0
libtpu: 0.0.40
codegen_flags: <defaults>
</compile_context>

<pallas_src>
import functools

import jax
import jax.numpy as jnp
import numpy as np
from jax import lax
from jax.experimental import pallas as pl
from jax.experimental.pallas import tpu as pltpu


# ----------------------------- Pallas kernel --------------------------------
def _bilstm_kernel(emb_ref, vmask_ref, wih_ref, bias_ref, whh_ref,
                   wout_ref, bout_ref,
                   out_ref, hid_ref,
                   xg_ref,
                   *, hidden_size):
    """Fused bidirectional LSTM over a padded batch + final Linear.

    emb_ref  : (T*B, E)     embedded tokens, time-major rows (t*B + b), B sublane-padded
    vmask_ref: (T, B, 2H)   per fused step s: [valid(t=s) | valid(t=T-1-s)], lane-dense
    wih_ref  : (E, 8H)      input weights, gate-major/dir-minor columns
    bias_ref : (1, 8H)      b_ih + b_hh, same column layout
    whh_ref  : (2H, 8H)     block-structured recurrent weights (h_f rows -> fwd cols,
                            h_b rows -> bwd cols)
    wout_ref : (2H, C), bout_ref: (1, C)
    out_ref  : (T, B, 2H)   padded LSTM outputs (fwd in [:H], bwd in [H:])
    hid_ref  : (B, C)       Linear(cat(h_fwd, h_bwd))
    xg_ref   : (T, B, 8H)   VMEM scratch for the hoisted input projection
    """
    H = hidden_size
    D2 = 2 * H
    G8 = 8 * H
    T, B, _ = vmask_ref.shape

    # ---- hoisted input projection for all timesteps & both directions (one MXU pass) ----
    xg = jnp.dot(emb_ref[...], wih_ref[...], preferred_element_type=jnp.float32)
    xg_ref[...] = (xg + bias_ref[...]).reshape(T, B, G8)

    # ---- hoisted constant lane masks (JAX does not CSE broadcasts inside loops) ----
    col8 = lax.broadcasted_iota(jnp.int32, (B, G8), 1)
    fwd_gate_cols = (col8 % D2) < H          # even H-wide blocks = forward direction
    col2 = lax.broadcasted_iota(jnp.int32, (B, D2), 1)
    fwd_out_cols = col2 < H                  # first H lanes of an output row = forward

    h = jnp.zeros((B, D2), jnp.float32)      # [h_fwd | h_bwd]
    c = jnp.zeros((B, D2), jnp.float32)

    # Fused, fully-unrolled time loop (T is static & small): forward handles t = s,
    # backward handles t = T-1-s; both directions share one recurrent MXU matmul.
    step_out = []                            # masked per-step h_new, one entry per s
    for s in range(T):
        tf = s
        tb = T - 1 - s

        rg = jnp.dot(h, whh_ref[...], preferred_element_type=jnp.float32)   # (B, 8H)
        # fwd columns take their x-projection from time tf, bwd columns from time tb.
        gates = rg + jnp.where(fwd_gate_cols, xg_ref[tf], xg_ref[tb])

        i = jax.nn.sigmoid(gates[:, 0:D2])
        f = jax.nn.sigmoid(gates[:, D2:2 * D2])
        g = jnp.tanh(gates[:, 2 * D2:3 * D2])
        o = jax.nn.sigmoid(gates[:, 3 * D2:4 * D2])
        c_new = f * c + i * g
        h_new = o * jnp.tanh(c_new)

        v = vmask_ref[s]                     # (B, 2H), lane-dense, pre-broadcast
        step_out.append(v * h_new)           # zeros past the sequence end
        c = c + v * (c_new - c)              # freeze state past the sequence end
        h = h + v * (h_new - h)

    # ---- lane-dense full-row output stores, off the recurrent critical path ----
    # fwd output at time t came from step s=t; bwd output at time t from step s=T-1-t.
    for t in range(T):
        out_ref[t] = jnp.where(fwd_out_cols, step_out[t], step_out[T - 1 - t])

    # ---- self.out(Linear) on cat(h_fwd, h_bwd) -- already contiguous in h ----
    hid_ref[...] = (jnp.dot(h, wout_ref[...], preferred_element_type=jnp.float32)
                    + bout_ref[...])


# ------------------------------- wrapper -------------------------------------
def _pack_cols(m_f, m_b, H):
    """(4H, X) PyTorch-ordered [i;f;g;o] fwd/bwd -> (X, 8H) gate-major/dir-minor cols."""
    cols = []
    for gi in range(4):
        cols.append(m_f[gi * H:(gi + 1) * H].T)
        cols.append(m_b[gi * H:(gi + 1) * H].T)
    return jnp.concatenate(cols, axis=1)


def _pack_bias(b_f, b_b, H):
    segs = []
    for gi in range(4):
        segs.append(b_f[gi * H:(gi + 1) * H])
        segs.append(b_b[gi * H:(gi + 1) * H])
    return jnp.concatenate(segs)[None, :]


def basic_encoder_forward(params, input_ids, input_lengths):
    """Equivalent of Basic_Encoder.forward(input, input_lengths) with bidirectional=True."""
    # Embedding lookup (gather) is glue; padding_idx=0 row is already zero in params.
    emb = params["embedding"][input_ids].astype(jnp.float32)         # (T, B, E)
    T, B, E = emb.shape
    H = params["w_hh_f"].shape[1]
    C = params["w_out"].shape[0]

    # ---- sublane-align the batch (pad B up to a multiple of 8, mask with valid=0) ----
    B_pad = ((B + 7) // 8) * 8
    pad = B_pad - B
    lengths = jnp.asarray(input_lengths, dtype=jnp.int32)
    if pad:
        emb = jnp.pad(emb, ((0, 0), (0, pad), (0, 0)))
        lengths = jnp.pad(lengths, (0, pad))                          # padded rows: len 0

    # ---- weight packing (all layout permutation folded into the weights) ----
    wih = _pack_cols(params["w_ih_f"], params["w_ih_b"], H)           # (E, 8H)
    bias = _pack_bias(params["b_ih_f"] + params["b_hh_f"],
                      params["b_ih_b"] + params["b_hh_b"], H)         # (1, 8H)
    whh = jnp.zeros((2 * H, 8 * H), dtype=jnp.float32)
    for gi in range(4):
        whh = whh.at[0:H, (2 * gi) * H:(2 * gi + 1) * H].set(
            params["w_hh_f"][gi * H:(gi + 1) * H].T)
        whh = whh.at[H:2 * H, (2 * gi + 1) * H:(2 * gi + 2) * H].set(
            params["w_hh_b"][gi * H:(gi + 1) * H].T)
    wout = params["w_out"].T                                          # (2H, C)
    bout = params["b_out"][None, :]                                   # (1, C)

    # ---- pre-broadcast, pre-paired validity mask: fwd half uses t=s, bwd half t=T-1-s ----
    valid = (jnp.arange(T, dtype=jnp.int32)[:, None] < lengths[None, :]).astype(jnp.float32)
    v_f = jnp.broadcast_to(valid[:, :, None], (T, B_pad, H))
    v_b = jnp.broadcast_to(valid[::-1][:, :, None], (T, B_pad, H))
    vmask = jnp.concatenate([v_f, v_b], axis=-1)                      # (T, B_pad, 2H)

    emb2d = emb.reshape(T * B_pad, E)                                 # time-major rows

    kernel = functools.partial(_bilstm_kernel, hidden_size=H)
    vmem = pl.BlockSpec(memory_space=pltpu.MemorySpace.VMEM)

    out_pad, hid_pad = pl.pallas_call(
        kernel,
        out_shape=(
            jax.ShapeDtypeStruct((T, B_pad, 2 * H), jnp.float32),
            jax.ShapeDtypeStruct((B_pad, C), jnp.float32),
        ),
        in_specs=[vmem] * 7,
        out_specs=(vmem, vmem),
        scratch_shapes=[pltpu.VMEM((T, B_pad, 8 * H), jnp.float32)],
    )(emb2d, vmask, wih, bias, whh, wout, bout)

    return out_pad[:, :B, :], hid_pad[:B, :]


# --------------------------- pure-JAX reference -------------------------------
def reference_forward(params, input_ids, input_lengths):
    emb = params["embedding"][input_ids].astype(jnp.float32)
    T, B, _ = emb.shape
    H = params["w_hh_f"].shape[1]
    lengths = jnp.asarray(input_lengths, dtype=jnp.int32)

    def run_dir(wih, whh, bih, bhh, reverse):
        def step(carry, t):
            h, c = carry
            x = emb[t]
            gates = x @ wih.T + h @ whh.T + bih + bhh
            i, f, g, o = jnp.split(gates, 4, axis=1)
            i, f, g, o = jax.nn.sigmoid(i), jax.nn.sigmoid(f), jnp.tanh(g), jax.nn.sigmoid(o)
            c_new = f * c + i * g
            h_new = o * jnp.tanh(c_new)
            valid = (t < lengths)[:, None].astype(jnp.float32)
            h = valid * h_new + (1.0 - valid) * h
            c = valid * c_new + (1.0 - valid) * c
            return (h, c), valid * h_new

        ts = jnp.arange(T - 1, -1, -1) if reverse else jnp.arange(T)
        (h, _), outs = lax.scan(step, (jnp.zeros((B, H)), jnp.zeros((B, H))), ts)
        if reverse:
            outs = outs[::-1]
        return outs, h

    out_f, h_f = run_dir(params["w_ih_f"], params["w_hh_f"], params["b_ih_f"], params["b_hh_f"], False)
    out_b, h_b = run_dir(params["w_ih_b"], params["w_hh_b"], params["b_ih_b"], params["b_hh_b"], True)
    outputs = jnp.concatenate([out_f, out_b], axis=-1)
    h_cat = jnp.concatenate([h_f, h_b], axis=-1)
    hidden_0 = h_cat @ params["w_out"].T + params["b_out"]
    return outputs, hidden_0


# --------------------------------- main ---------------------------------------
if __name__ == "__main__":
    # Module hyperparameters (small, consistent with the PyTorch __init__).
    VOCAB = 16          # input_size
    E = 32              # embedding_size
    C = 16              # instruction_context_size
    H = 32              # hidden_size
    T, B = 8, 4         # seq_len, batch (lengths descending, like enforce_sorted)

    key = jax.random.PRNGKey(0)
    ks = jax.random.split(key, 12)
    bound = 1.0 / np.sqrt(H)

    def u(k, shape):
        return jax.random.uniform(k, shape, jnp.float32, -bound, bound)

    embedding = jax.random.normal(ks[0], (VOCAB, E), jnp.float32)
    embedding = embedding.at[0].set(0.0)  # padding_idx=0

    params = {
        "embedding": embedding,
        # forward direction
        "w_ih_f": u(ks[1], (4 * H, E)), "w_hh_f": u(ks[2], (4 * H, H)),
        "b_ih_f": u(ks[3], (4 * H,)),   "b_hh_f": u(ks[4], (4 * H,)),
        # reverse direction
        "w_ih_b": u(ks[5], (4 * H, E)), "w_hh_b": u(ks[6], (4 * H, H)),
        "b_ih_b": u(ks[7], (4 * H,)),   "b_hh_b": u(ks[8], (4 * H,)),
        # self.out Linear(2H -> C)
        "w_out": u(ks[9], (C, 2 * H)),  "b_out": u(ks[10], (C,)),
    }

    # Padded, length-sorted batch of token ids (pad token = 0).
    lengths = jnp.array([8, 6, 5, 3], dtype=jnp.int32)               # descending
    ids = jax.random.randint(ks[11], (T, B), 1, VOCAB, dtype=jnp.int32)
    t_idx = jnp.arange(T)[:, None]
    input_ids = jnp.where(t_idx < lengths[None, :], ids, 0)          # (T, B)

    outputs, hidden_0 = jax.jit(basic_encoder_forward)(params, input_ids, lengths)
    jax.block_until_ready((outputs, hidden_0))

    ref_out, ref_hid = reference_forward(params, input_ids, lengths)
    np.testing.assert_allclose(np.asarray(outputs), np.asarray(ref_out), rtol=1e-5, atol=1e-5)
    np.testing.assert_allclose(np.asarray(hidden_0), np.asarray(ref_hid), rtol=1e-5, atol=1e-5)

    print("KERNEL_OK")
</pallas_src>

<mosaic_0001>
module attributes {stable_mosaic.version = 11 : i64} {
  func.func @_bilstm_kernel(%arg0: memref<64x32xf32, #tpu.memory_space<vmem>>, %arg1: memref<8x8x64xf32, #tpu.memory_space<vmem>>, %arg2: memref<32x256xf32, #tpu.memory_space<vmem>>, %arg3: memref<1x256xf32, #tpu.memory_space<vmem>>, %arg4: memref<64x256xf32, #tpu.memory_space<vmem>>, %arg5: memref<64x16xf32, #tpu.memory_space<vmem>>, %arg6: memref<1x16xf32, #tpu.memory_space<vmem>>, %arg7: memref<8x8x64xf32, #tpu.memory_space<vmem>>, %arg8: memref<8x16xf32, #tpu.memory_space<vmem>>, %arg9: memref<8x8x256xf32, #tpu.memory_space<vmem>>) attributes {dimension_semantics = [], scalar_prefetch = 0 : i64, scratch_operands = 1 : i64, tpu.core_type = #tpu.core_type<tc>} {
    %c0 = arith.constant 0 : index
    %c0_0 = arith.constant 0 : index
    %0 = vector.load %arg0[%c0, %c0_0] : memref<64x32xf32, #tpu.memory_space<vmem>>, vector<64x32xf32>
    %c0_1 = arith.constant 0 : index
    %c0_2 = arith.constant 0 : index
    %1 = vector.load %arg2[%c0_1, %c0_2] : memref<32x256xf32, #tpu.memory_space<vmem>>, vector<32x256xf32>
    %cst = arith.constant dense<0.000000e+00> : vector<64x256xf32>
    %2 = tpu.matmul %0, %1, %cst {dimension_numbers = #tpu.dot_dimension_numbers<[1], [0], [0], [1], [0, 0, 1, 1], [], []>} : vector<64x32xf32>, vector<32x256xf32>, vector<64x256xf32> -> vector<64x256xf32>
    %c0_3 = arith.constant 0 : index
    %c0_4 = arith.constant 0 : index
    %3 = vector.load %arg3[%c0_3, %c0_4] : memref<1x256xf32, #tpu.memory_space<vmem>>, vector<1x256xf32>
    %4 = vector.broadcast %3 : vector<1x256xf32> to vector<64x256xf32>
    %5 = arith.addf %2, %4 : vector<64x256xf32>
    %6 = vector.shape_cast %5 : vector<64x256xf32> to vector<8x8x256xf32>
    %c0_5 = arith.constant 0 : index
    %c0_6 = arith.constant 0 : index
    %c0_7 = arith.constant 0 : index
    %7 = vector.load %arg9[%c0_5, %c0_6, %c0_7] : memref<8x8x256xf32, #tpu.memory_space<vmem>>, vector<8x8x256xf32>
    tpu.vector_store %arg9[%c0_5, %c0_6, %c0_7], %6 {strides = array<i32>} : memref<8x8x256xf32, #tpu.memory_space<vmem>>, vector<8x8x256xf32>,
    %8 = tpu.iota {dimensions = array<i32: 1>} : vector<8x256xi32>
    %c64_i32 = arith.constant 64 : i32
    %c0_i32 = arith.constant 0 : i32
    %9 = arith.cmpi eq, %c64_i32, %c0_i32 : i32
    %c1_i32 = arith.constant 1 : i32
    %10 = arith.select %9, %c1_i32, %c64_i32 : i32
    %11 = vector.broadcast %10 : i32 to vector<8x256xi32>
    %12 = arith.remsi %8, %11 : vector<8x256xi32>
    %c0_i32_8 = arith.constant 0 : i32
    %13 = vector.broadcast %c0_i32_8 : i32 to vector<8x256xi32>
    %14 = arith.cmpi ne, %12, %13 : vector<8x256xi32>
    %c0_i32_9 = arith.constant 0 : i32
    %15 = vector.broadcast %c0_i32_9 : i32 to vector<8x256xi32>
    %16 = arith.cmpi slt, %12, %15 : vector<8x256xi32>
    %c0_i32_10 = arith.constant 0 : i32
    %17 = arith.cmpi slt, %10, %c0_i32_10 : i32
    %18 = vector.broadcast %17 : i1 to vector<8x256xi1>
    %19 = vector.broadcast %18 : vector<8x256xi1> to vector<8x256xi1>
    %20 = arith.xori %16, %19 : vector<8x256xi1>
    %21 = arith.andi %20, %14 : vector<8x256xi1>
    %22 = vector.broadcast %10 : i32 to vector<8x256xi32>
    %23 = arith.addi %12, %22 : vector<8x256xi32>
    %24 = arith.select %21, %23, %12 : vector<8x256xi1>, vector<8x256xi32>
    %c32_i32 = arith.constant 32 : i32
    %25 = vector.broadcast %c32_i32 : i32 to vector<8x256xi32>
    %26 = arith.cmpi slt, %24, %25 : vector<8x256xi32>
    %27 = tpu.iota {dimensions = array<i32: 1>} : vector<8x64xi32>
    %c32_i32_11 = arith.constant 32 : i32
    %28 = vector.broadcast %c32_i32_11 : i32 to vector<8x64xi32>
    %29 = arith.cmpi slt, %27, %28 : vector<8x64xi32>
    %cst_12 = arith.constant 0.000000e+00 : f32
    %30 = vector.broadcast %cst_12 : f32 to vector<8x64xf32>
    %cst_13 = arith.constant 0.000000e+00 : f32
    %31 = vector.broadcast %cst_13 : f32 to vector<8x64xf32>
    %c0_14 = arith.constant 0 : index
    %c0_15 = arith.constant 0 : index
    %32 = vector.load %arg4[%c0_14, %c0_15] : memref<64x256xf32, #tpu.memory_space<vmem>>, vector<64x256xf32>
    %cst_16 = arith.constant dense<0.000000e+00> : vector<8x256xf32>
    %33 = tpu.matmul %30, %32, %cst_16 {dimension_numbers = #tpu.dot_dimension_numbers<[1], [0], [0], [1], [0, 0, 1, 1], [], []>} : vector<8x64xf32>, vector<64x256xf32>, vector<8x256xf32> -> vector<8x256xf32>
    %c0_17 = arith.constant 0 : index
    %c0_18 = arith.constant 0 : index
    %c0_19 = arith.constant 0 : index
    %34 = vector.load %arg9[%c0_17, %c0_18, %c0_19] : memref<8x8x256xf32, #tpu.memory_space<vmem>>, vector<1x8x256xf32>
    %35 = vector.shape_cast %34 : vector<1x8x256xf32> to vector<8x256xf32>
    %c7 = arith.constant 7 : index
    %c0_20 = arith.constant 0 : index
    %c0_21 = arith.constant 0 : index
    %36 = vector.load %arg9[%c7, %c0_20, %c0_21] : memref<8x8x256xf32, #tpu.memory_space<vmem>>, vector<1x8x256xf32>
    %37 = vector.shape_cast %36 : vector<1x8x256xf32> to vector<8x256xf32>
    %38 = arith.select %26, %35, %37 : vector<8x256xi1>, vector<8x256xf32>
    %39 = arith.addf %33, %38 : vector<8x256xf32>
    %40 = vector.extract_strided_slice %39 {offsets = [0, 0], sizes = [8, 64], strides = [1, 1]} : vector<8x256xf32> to vector<8x64xf32>
    %41 = arith.negf %40 : vector<8x64xf32>
    %42 = math.exp %41 : vector<8x64xf32>
    %cst_22 = arith.constant 1.000000e+00 : f32
    %43 = vector.broadcast %cst_22 : f32 to vector<8x64xf32>
    %44 = arith.addf %43, %42 : vector<8x64xf32>
    %45 = arith.divf %43, %44 : vector<8x64xf32>
    %46 = vector.extract_strided_slice %39 {offsets = [0, 64], sizes = [8, 64], strides = [1, 1]} : vector<8x256xf32> to vector<8x64xf32>
    %47 = arith.negf %46 : vector<8x64xf32>
    %48 = math.exp %47 : vector<8x64xf32>
    %cst_23 = arith.constant 1.000000e+00 : f32
    %49 = vector.broadcast %cst_23 : f32 to vector<8x64xf32>
    %50 = arith.addf %49, %48 : vector<8x64xf32>
    %51 = arith.divf %49, %50 : vector<8x64xf32>
    %52 = vector.extract_strided_slice %39 {offsets = [0, 128], sizes = [8, 64], strides = [1, 1]} : vector<8x256xf32> to vector<8x64xf32>
    %53 = math.tanh %52 : vector<8x64xf32>
    %54 = vector.extract_strided_slice %39 {offsets = [0, 192], sizes = [8, 64], strides = [1, 1]} : vector<8x256xf32> to vector<8x64xf32>
    %55 = arith.negf %54 : vector<8x64xf32>
    %56 = math.exp %55 : vector<8x64xf32>
    %cst_24 = arith.constant 1.000000e+00 : f32
    %57 = vector.broadcast %cst_24 : f32 to vector<8x64xf32>
    %58 = arith.addf %57, %56 : vector<8x64xf32>
    %59 = arith.divf %57, %58 : vector<8x64xf32>
    %60 = arith.mulf %51, %31 : vector<8x64xf32>
    %61 = arith.mulf %45, %53 : vector<8x64xf32>
    %62 = arith.addf %60, %61 : vector<8x64xf32>
    %63 = math.tanh %62 : vector<8x64xf32>
    %64 = arith.mulf %59, %63 : vector<8x64xf32>
    %c0_25 = arith.constant 0 : index
    %c0_26 = arith.constant 0 : index
    %c0_27 = arith.constant 0 : index
    %65 = vector.load %arg1[%c0_25, %c0_26, %c0_27] : memref<8x8x64xf32, #tpu.memory_space<vmem>>, vector<1x8x64xf32>
    %66 = vector.shape_cast %65 : vector<1x8x64xf32> to vector<8x64xf32>
    %67 = arith.mulf %66, %64 : vector<8x64xf32>
    %68 = arith.subf %62, %31 : vector<8x64xf32>
    %69 = arith.mulf %66, %68 : vector<8x64xf32>
    %70 = arith.addf %31, %69 : vector<8x64xf32>
    %71 = arith.subf %64, %30 : vector<8x64xf32>
    %72 = arith.mulf %66, %71 : vector<8x64xf32>
    %73 = arith.addf %30, %72 : vector<8x64xf32>
    %c0_28 = arith.constant 0 : index
    %c0_29 = arith.constant 0 : index
    %74 = vector.load %arg4[%c0_28, %c0_29] : memref<64x256xf32, #tpu.memory_space<vmem>>, vector<64x256xf32>
    %cst_30 = arith.constant dense<0.000000e+00> : vector<8x256xf32>
    %75 = tpu.matmul %73, %74, %cst_30 {dimension_numbers = #tpu.dot_dimension_numbers<[1], [0], [0], [1], [0, 0, 1, 1], [], []>} : vector<8x64xf32>, vector<64x256xf32>, vector<8x256xf32> -> vector<8x256xf32>
    %c1 = arith.constant 1 : index
    %c0_31 = arith.constant 0 : index
    %c0_32 = arith.constant 0 : index
    %76 = vector.load %arg9[%c1, %c0_31, %c0_32] : memref<8x8x256xf32, #tpu.memory_space<vmem>>, vector<1x8x256xf32>
    %77 = vector.shape_cast %76 : vector<1x8x256xf32> to vector<8x256xf32>
    %c6 = arith.constant 6 : index
    %c0_33 = arith.constant 0 : index
    %c0_34 = arith.constant 0 : index
    %78 = vector.load %arg9[%c6, %c0_33, %c0_34] : memref<8x8x256xf32, #tpu.memory_space<vmem>>, vector<1x8x256xf32>
    %79 = vector.shape_cast %78 : vector<1x8x256xf32> to vector<8x256xf32>
    %80 = arith.select %26, %77, %79 : vector<8x256xi1>, vector<8x256xf32>
    %81 = arith.addf %75, %80 : vector<8x256xf32>
    %82 = vector.extract_strided_slice %81 {offsets = [0, 0], sizes = [8, 64], strides = [1, 1]} : vector<8x256xf32> to vector<8x64xf32>
    %83 = arith.negf %82 : vector<8x64xf32>
    %84 = math.exp %83 : vector<8x64xf32>
    %cst_35 = arith.constant 1.000000e+00 : f32
    %85 = vector.broadcast %cst_35 : f32 to vector<8x64xf32>
    %86 = arith.addf %85, %84 : vector<8x64xf32>
    %87 = arith.divf %85, %86 : vector<8x64xf32>
    %88 = vector.extract_strided_slice %81 {offsets = [0, 64], sizes = [8, 64], strides = [1, 1]} : vector<8x256xf32> to vector<8x64xf32>
    %89 = arith.negf %88 : vector<8x64xf32>
    %90 = math.exp %89 : vector<8x64xf32>
    %cst_36 = arith.constant 1.000000e+00 : f32
    %91 = vector.broadcast %cst_36 : f32 to vector<8x64xf32>
    %92 = arith.addf %91, %90 : vector<8x64xf32>
    %93 = arith.divf %91, %92 : vector<8x64xf32>
    %94 = vector.extract_strided_slice %81 {offsets = [0, 128], sizes = [8, 64], strides = [1, 1]} : vector<8x256xf32> to vector<8x64xf32>
    %95 = math.tanh %94 : vector<8x64xf32>
    %96 = vector.extract_strided_slice %81 {offsets = [0, 192], sizes = [8, 64], strides = [1, 1]} : vector<8x256xf32> to vector<8x64xf32>
    %97 = arith.negf %96 : vector<8x64xf32>
    %98 = math.exp %97 : vector<8x64xf32>
    %cst_37 = arith.constant 1.000000e+00 : f32
    %99 = vector.broadcast %cst_37 : f32 to vector<8x64xf32>
    %100 = arith.addf %99, %98 : vector<8x64xf32>
    %101 = arith.divf %99, %100 : vector<8x64xf32>
    %102 = arith.mulf %93, %70 : vector<8x64xf32>
    %103 = arith.mulf %87, %95 : vector<8x64xf32>
    %104 = arith.addf %102, %103 : vector<8x64xf32>
    %105 = math.tanh %104 : vector<8x64xf32>
    %106 = arith.mulf %101, %105 : vector<8x64xf32>
    %c1_38 = arith.constant 1 : index
    %c0_39 = arith.constant 0 : index
    %c0_40 = arith.constant 0 : index
    %107 = vector.load %arg1[%c1_38, %c0_39, %c0_40] : memref<8x8x64xf32, #tpu.memory_space<vmem>>, vector<1x8x64xf32>
    %108 = vector.shape_cast %107 : vector<1x8x64xf32> to vector<8x64xf32>
    %109 = arith.mulf %108, %106 : vector<8x64xf32>
    %110 = arith.subf %104, %70 : vector<8x64xf32>
    %111 = arith.mulf %108, %110 : vector<8x64xf32>
    %112 = arith.addf %70, %111 : vector<8x64xf32>
    %113 = arith.subf %106, %73 : vector<8x64xf32>
    %114 = arith.mulf %108, %113 : vector<8x64xf32>
    %115 = arith.addf %73, %114 : vector<8x64xf32>
    %c0_41 = arith.constant 0 : index
    %c0_42 = arith.constant 0 : index
    %116 = vector.load %arg4[%c0_41, %c0_42] : memref<64x256xf32, #tpu.memory_space<vmem>>, vector<64x256xf32>
    %cst_43 = arith.constant dense<0.000000e+00> : vector<8x256xf32>
    %117 = tpu.matmul %115, %116, %cst_43 {dimension_numbers = #tpu.dot_dimension_numbers<[1], [0], [0], [1], [0, 0, 1, 1], [], []>} : vector<8x64xf32>, vector<64x256xf32>, vector<8x256xf32> -> vector<8x256xf32>
    %c2 = arith.constant 2 : index
    %c0_44 = arith.constant 0 : index
    %c0_45 = arith.constant 0 : index
    %118 = vector.load %arg9[%c2, %c0_44, %c0_45] : memref<8x8x256xf32, #tpu.memory_space<vmem>>, vector<1x8x256xf32>
    %119 = vector.shape_cast %118 : vector<1x8x256xf32> to vector<8x256xf32>
    %c5 = arith.constant 5 : index
    %c0_46 = arith.constant 0 : index
    %c0_47 = arith.constant 0 : index
    %120 = vector.load %arg9[%c5, %c0_46, %c0_47] : memref<8x8x256xf32, #tpu.memory_space<vmem>>, vector<1x8x256xf32>
    %121 = vector.shape_cast %120 : vector<1x8x256xf32> to vector<8x256xf32>
    %122 = arith.select %26, %119, %121 : vector<8x256xi1>, vector<8x256xf32>
    %123 = arith.addf %117, %122 : vector<8x256xf32>
    %124 = vector.extract_strided_slice %123 {offsets = [0, 0], sizes = [8, 64], strides = [1, 1]} : vector<8x256xf32> to vector<8x64xf32>
    %125 = arith.negf %124 : vector<8x64xf32>
    %126 = math.exp %125 : vector<8x64xf32>
    %cst_48 = arith.constant 1.000000e+00 : f32
    %127 = vector.broadcast %cst_48 : f32 to vector<8x64xf32>
    %128 = arith.addf %127, %126 : vector<8x64xf32>
    %129 = arith.divf %127, %128 : vector<8x64xf32>
    %130 = vector.extract_strided_slice %123 {offsets = [0, 64], sizes = [8, 64], strides = [1, 1]} : vector<8x256xf32> to vector<8x64xf32>
    %131 = arith.negf %130 : vector<8x64xf32>
    %132 = math.exp %131 : vector<8x64xf32>
    %cst_49 = arith.constant 1.000000e+00 : f32
    %133 = vector.broadcast %cst_49 : f32 to vector<8x64xf32>
    %134 = arith.addf %133, %132 : vector<8x64xf32>
    %135 = arith.divf %133, %134 : vector<8x64xf32>
    %136 = vector.extract_strided_slice %123 {offsets = [0, 128], sizes = [8, 64], strides = [1, 1]} : vector<8x256xf32> to vector<8x64xf32>
    %137 = math.tanh %136 : vector<8x64xf32>
    %138 = vector.extract_strided_slice %123 {offsets = [0, 192], sizes = [8, 64], strides = [1, 1]} : vector<8x256xf32> to vector<8x64xf32>
    %139 = arith.negf %138 : vector<8x64xf32>
    %140 = math.exp %139 : vector<8x64xf32>
    %cst_50 = arith.constant 1.000000e+00 : f32
    %141 = vector.broadcast %cst_50 : f32 to vector<8x64xf32>
    %142 = arith.addf %141, %140 : vector<8x64xf32>
    %143 = arith.divf %141, %142 : vector<8x64xf32>
    %144 = arith.mulf %135, %112 : vector<8x64xf32>
    %145 = arith.mulf %129, %137 : vector<8x64xf32>
    %146 = arith.addf %144, %145 : vector<8x64xf32>
    %147 = math.tanh %146 : vector<8x64xf32>
    %148 = arith.mulf %143, %147 : vector<8x64xf32>
    %c2_51 = arith.constant 2 : index
    %c0_52 = arith.constant 0 : index
    %c0_53 = arith.constant 0 : index
    %149 = vector.load %arg1[%c2_51, %c0_52, %c0_53] : memref<8x8x64xf32, #tpu.memory_space<vmem>>, vector<1x8x64xf32>
    %150 = vector.shape_cast %149 : vector<1x8x64xf32> to vector<8x64xf32>
    %151 = arith.mulf %150, %148 : vector<8x64xf32>
    %152 = arith.subf %146, %112 : vector<8x64xf32>
    %153 = arith.mulf %150, %152 : vector<8x64xf32>
    %154 = arith.addf %112, %153 : vector<8x64xf32>
    %155 = arith.subf %148, %115 : vector<8x64xf32>
    %156 = arith.mulf %150, %155 : vector<8x64xf32>
    %157 = arith.addf %115, %156 : vector<8x64xf32>
    %c0_54 = arith.constant 0 : index
    %c0_55 = arith.constant 0 : index
    %158 = vector.load %arg4[%c0_54, %c0_55] : memref<64x256xf32, #tpu.memory_space<vmem>>, vector<64x256xf32>
    %cst_56 = arith.constant dense<0.000000e+00> : vector<8x256xf32>
    %159 = tpu.matmul %157, %158, %cst_56 {dimension_numbers = #tpu.dot_dimension_numbers<[1], [0], [0], [1], [0, 0, 1, 1], [], []>} : vector<8x64xf32>, vector<64x256xf32>, vector<8x256xf32> -> vector<8x256xf32>
    %c3 = arith.constant 3 : index
    %c0_57 = arith.constant 0 : index
    %c0_58 = arith.constant 0 : index
    %160 = vector.load %arg9[%c3, %c0_57, %c0_58] : memref<8x8x256xf32, #tpu.memory_space<vmem>>, vector<1x8x256xf32>
    %161 = vector.shape_cast %160 : vector<1x8x256xf32> to vector<8x256xf32>
    %c4 = arith.constant 4 : index
    %c0_59 = arith.constant 0 : index
    %c0_60 = arith.constant 0 : index
    %162 = vector.load %arg9[%c4, %c0_59, %c0_60] : memref<8x8x256xf32, #tpu.memory_space<vmem>>, vector<1x8x256xf32>
    %163 = vector.shape_cast %162 : vector<1x8x256xf32> to vector<8x256xf32>
    %164 = arith.select %26, %161, %163 : vector<8x256xi1>, vector<8x256xf32>
    %165 = arith.addf %159, %164 : vector<8x256xf32>
    %166 = vector.extract_strided_slice %165 {offsets = [0, 0], sizes = [8, 64], strides = [1, 1]} : vector<8x256xf32> to vector<8x64xf32>
    %167 = arith.negf %166 : vector<8x64xf32>
    %168 = math.exp %167 : vector<8x64xf32>
    %cst_61 = arith.constant 1.000000e+00 : f32
    %169 = vector.broadcast %cst_61 : f32 to vector<8x64xf32>
    %170 = arith.addf %169, %168 : vector<8x64xf32>
    %171 = arith.divf %169, %170 : vector<8x64xf32>
    %172 = vector.extract_strided_slice %165 {offsets = [0, 64], sizes = [8, 64], strides = [1, 1]} : vector<8x256xf32> to vector<8x64xf32>
    %173 = arith.negf %172 : vector<8x64xf32>
    %174 = math.exp %173 : vector<8x64xf32>
    %cst_62 = arith.constant 1.000000e+00 : f32
    %175 = vector.broadcast %cst_62 : f32 to vector<8x64xf32>
    %176 = arith.addf %175, %174 : vector<8x64xf32>
    %177 = arith.divf %175, %176 : vector<8x64xf32>
    %178 = vector.extract_strided_slice %165 {offsets = [0, 128], sizes = [8, 64], strides = [1, 1]} : vector<8x256xf32> to vector<8x64xf32>
    %179 = math.tanh %178 : vector<8x64xf32>
    %180 = vector.extract_strided_slice %165 {offsets = [0, 192], sizes = [8, 64], strides = [1, 1]} : vector<8x256xf32> to vector<8x64xf32>
    %181 = arith.negf %180 : vector<8x64xf32>
    %182 = math.exp %181 : vector<8x64xf32>
    %cst_63 = arith.constant 1.000000e+00 : f32
    %183 = vector.broadcast %cst_63 : f32 to vector<8x64xf32>
    %184 = arith.addf %183, %182 : vector<8x64xf32>
    %185 = arith.divf %183, %184 : vector<8x64xf32>
    %186 = arith.mulf %177, %154 : vector<8x64xf32>
    %187 = arith.mulf %171, %179 : vector<8x64xf32>
    %188 = arith.addf %186, %187 : vector<8x64xf32>
    %189 = math.tanh %188 : vector<8x64xf32>
    %190 = arith.mulf %185, %189 : vector<8x64xf32>
    %c3_64 = arith.constant 3 : index
    %c0_65 = arith.constant 0 : index
    %c0_66 = arith.constant 0 : index
    %191 = vector.load %arg1[%c3_64, %c0_65, %c0_66] : memref<8x8x64xf32, #tpu.memory_space<vmem>>, vector<1x8x64xf32>
    %192 = vector.shape_cast %191 : vector<1x8x64xf32> to vector<8x64xf32>
    %193 = arith.mulf %192, %190 : vector<8x64xf32>
    %194 = arith.subf %188, %154 : vector<8x64xf32>
    %195 = arith.mulf %192, %194 : vector<8x64xf32>
    %196 = arith.addf %154, %195 : vector<8x64xf32>
    %197 = arith.subf %190, %157 : vector<8x64xf32>
    %198 = arith.mulf %192, %197 : vector<8x64xf32>
    %199 = arith.addf %157, %198 : vector<8x64xf32>
    %c0_67 = arith.constant 0 : index
    %c0_68 = arith.constant 0 : index
    %200 = vector.load %arg4[%c0_67, %c0_68] : memref<64x256xf32, #tpu.memory_space<vmem>>, vector<64x256xf32>
    %cst_69 = arith.constant dense<0.000000e+00> : vector<8x256xf32>
    %201 = tpu.matmul %199, %200, %cst_69 {dimension_numbers = #tpu.dot_dimension_numbers<[1], [0], [0], [1], [0, 0, 1, 1], [], []>} : vector<8x64xf32>, vector<64x256xf32>, vector<8x256xf32> -> vector<8x256xf32>
    %c4_70 = arith.constant 4 : index
    %c0_71 = arith.constant 0 : index
    %c0_72 = arith.constant 0 : index
    %202 = vector.load %arg9[%c4_70, %c0_71, %c0_72] : memref<8x8x256xf32, #tpu.memory_space<vmem>>, vector<1x8x256xf32>
    %203 = vector.shape_cast %202 : vector<1x8x256xf32> to vector<8x256xf32>
    %c3_73 = arith.constant 3 : index
    %c0_74 = arith.constant 0 : index
    %c0_75 = arith.constant 0 : index
    %204 = vector.load %arg9[%c3_73, %c0_74, %c0_75] : memref<8x8x256xf32, #tpu.memory_space<vmem>>, vector<1x8x256xf32>
    %205 = vector.shape_cast %204 : vector<1x8x256xf32> to vector<8x256xf32>
    %206 = arith.select %26, %203, %205 : vector<8x256xi1>, vector<8x256xf32>
    %207 = arith.addf %201, %206 : vector<8x256xf32>
    %208 = vector.extract_strided_slice %207 {offsets = [0, 0], sizes = [8, 64], strides = [1, 1]} : vector<8x256xf32> to vector<8x64xf32>
    %209 = arith.negf %208 : vector<8x64xf32>
    %210 = math.exp %209 : vector<8x64xf32>
    %cst_76 = arith.constant 1.000000e+00 : f32
    %211 = vector.broadcast %cst_76 : f32 to vector<8x64xf32>
    %212 = arith.addf %211, %210 : vector<8x64xf32>
    %213 = arith.divf %211, %212 : vector<8x64xf32>
    %214 = vector.extract_strided_slice %207 {offsets = [0, 64], sizes = [8, 64], strides = [1, 1]} : vector<8x256xf32> to vector<8x64xf32>
    %215 = arith.negf %214 : vector<8x64xf32>
    %216 = math.exp %215 : vector<8x64xf32>
    %cst_77 = arith.constant 1.000000e+00 : f32
    %217 = vector.broadcast %cst_77 : f32 to vector<8x64xf32>
    %218 = arith.addf %217, %216 : vector<8x64xf32>
    %219 = arith.divf %217, %218 : vector<8x64xf32>
    %220 = vector.extract_strided_slice %207 {offsets = [0, 128], sizes = [8, 64], strides = [1, 1]} : vector<8x256xf32> to vector<8x64xf32>
    %221 = math.tanh %220 : vector<8x64xf32>
    %222 = vector.extract_strided_slice %207 {offsets = [0, 192], sizes = [8, 64], strides = [1, 1]} : vector<8x256xf32> to vector<8x64xf32>
    %223 = arith.negf %222 : vector<8x64xf32>
    %224 = math.exp %223 : vector<8x64xf32>
    %cst_78 = arith.constant 1.000000e+00 : f32
    %225 = vector.broadcast %cst_78 : f32 to vector<8x64xf32>
    %226 = arith.addf %225, %224 : vector<8x64xf32>
    %227 = arith.divf %225, %226 : vector<8x64xf32>
    %228 = arith.mulf %219, %196 : vector<8x64xf32>
    %229 = arith.mulf %213, %221 : vector<8x64xf32>
    %230 = arith.addf %228, %229 : vector<8x64xf32>
    %231 = math.tanh %230 : vector<8x64xf32>
    %232 = arith.mulf %227, %231 : vector<8x64xf32>
    %c4_79 = arith.constant 4 : index
    %c0_80 = arith.constant 0 : index
    %c0_81 = arith.constant 0 : index
    %233 = vector.load %arg1[%c4_79, %c0_80, %c0_81] : memref<8x8x64xf32, #tpu.memory_space<vmem>>, vector<1x8x64xf32>
    %234 = vector.shape_cast %233 : vector<1x8x64xf32> to vector<8x64xf32>
    %235 = arith.mulf %234, %232 : vector<8x64xf32>
    %236 = arith.subf %230, %196 : vector<8x64xf32>
    %237 = arith.mulf %234, %236 : vector<8x64xf32>
    %238 = arith.addf %196, %237 : vector<8x64xf32>
    %239 = arith.subf %232, %199 : vector<8x64xf32>
    %240 = arith.mulf %234, %239 : vector<8x64xf32>
    %241 = arith.addf %199, %240 : vector<8x64xf32>
    %c0_82 = arith.constant 0 : index
    %c0_83 = arith.constant 0 : index
    %242 = vector.load %arg4[%c0_82, %c0_83] : memref<64x256xf32, #tpu.memory_space<vmem>>, vector<64x256xf32>
    %cst_84 = arith.constant dense<0.000000e+00> : vector<8x256xf32>
    %243 = tpu.matmul %241, %242, %cst_84 {dimension_numbers = #tpu.dot_dimension_numbers<[1], [0], [0], [1], [0, 0, 1, 1], [], []>} : vector<8x64xf32>, vector<64x256xf32>, vector<8x256xf32> -> vector<8x256xf32>
    %c5_85 = arith.constant 5 : index
    %c0_86 = arith.constant 0 : index
    %c0_87 = arith.constant 0 : index
    %244 = vector.load %arg9[%c5_85, %c0_86, %c0_87] : memref<8x8x256xf32, #tpu.memory_space<vmem>>, vector<1x8x256xf32>
    %245 = vector.shape_cast %244 : vector<1x8x256xf32> to vector<8x256xf32>
    %c2_88 = arith.constant 2 : index
    %c0_89 = arith.constant 0 : index
    %c0_90 = arith.constant 0 : index
    %246 = vector.load %arg9[%c2_88, %c0_89, %c0_90] : memref<8x8x256xf32, #tpu.memory_space<vmem>>, vector<1x8x256xf32>
    %247 = vector.shape_cast %246 : vector<1x8x256xf32> to vector<8x256xf32>
    %248 = arith.select %26, %245, %247 : vector<8x256xi1>, vector<8x256xf32>
    %249 = arith.addf %243, %248 : vector<8x256xf32>
    %250 = vector.extract_strided_slice %249 {offsets = [0, 0], sizes = [8, 64], strides = [1, 1]} : vector<8x256xf32> to vector<8x64xf32>
    %251 = arith.negf %250 : vector<8x64xf32>
    %252 = math.exp %251 : vector<8x64xf32>
    %cst_91 = arith.constant 1.000000e+00 : f32
    %253 = vector.broadcast %cst_91 : f32 to vector<8x64xf32>
    %254 = arith.addf %253, %252 : vector<8x64xf32>
    %255 = arith.divf %253, %254 : vector<8x64xf32>
    %256 = vector.extract_strided_slice %249 {offsets = [0, 64], sizes = [8, 64], strides = [1, 1]} : vector<8x256xf32> to vector<8x64xf32>
    %257 = arith.negf %256 : vector<8x64xf32>
    %258 = math.exp %257 : vector<8x64xf32>
    %cst_92 = arith.constant 1.000000e+00 : f32
    %259 = vector.broadcast %cst_92 : f32 to vector<8x64xf32>
    %260 = arith.addf %259, %258 : vector<8x64xf32>
    %261 = arith.divf %259, %260 : vector<8x64xf32>
    %262 = vector.extract_strided_slice %249 {offsets = [0, 128], sizes = [8, 64], strides = [1, 1]} : vector<8x256xf32> to vector<8x64xf32>
    %263 = math.tanh %262 : vector<8x64xf32>
    %264 = vector.extract_strided_slice %249 {offsets = [0, 192], sizes = [8, 64], strides = [1, 1]} : vector<8x256xf32> to vector<8x64xf32>
    %265 = arith.negf %264 : vector<8x64xf32>
    %266 = math.exp %265 : vector<8x64xf32>
    %cst_93 = arith.constant 1.000000e+00 : f32
    %267 = vector.broadcast %cst_93 : f32 to vector<8x64xf32>
    %268 = arith.addf %267, %266 : vector<8x64xf32>
    %269 = arith.divf %267, %268 : vector<8x64xf32>
    %270 = arith.mulf %261, %238 : vector<8x64xf32>
    %271 = arith.mulf %255, %263 : vector<8x64xf32>
    %272 = arith.addf %270, %271 : vector<8x64xf32>
    %273 = math.tanh %272 : vector<8x64xf32>
    %274 = arith.mulf %269, %273 : vector<8x64xf32>
    %c5_94 = arith.constant 5 : index
    %c0_95 = arith.constant 0 : index
    %c0_96 = arith.constant 0 : index
    %275 = vector.load %arg1[%c5_94, %c0_95, %c0_96] : memref<8x8x64xf32, #tpu.memory_space<vmem>>, vector<1x8x64xf32>
    %276 = vector.shape_cast %275 : vector<1x8x64xf32> to vector<8x64xf32>
    %277 = arith.mulf %276, %274 : vector<8x64xf32>
    %278 = arith.subf %272, %238 : vector<8x64xf32>
    %279 = arith.mulf %276, %278 : vector<8x64xf32>
    %280 = arith.addf %238, %279 : vector<8x64xf32>
    %281 = arith.subf %274, %241 : vector<8x64xf32>
    %282 = arith.mulf %276, %281 : vector<8x64xf32>
    %283 = arith.addf %241, %282 : vector<8x64xf32>
    %c0_97 = arith.constant 0 : index
    %c0_98 = arith.constant 0 : index
    %284 = vector.load %arg4[%c0_97, %c0_98] : memref<64x256xf32, #tpu.memory_space<vmem>>, vector<64x256xf32>
    %cst_99 = arith.constant dense<0.000000e+00> : vector<8x256xf32>
    %285 = tpu.matmul %283, %284, %cst_99 {dimension_numbers = #tpu.dot_dimension_numbers<[1], [0], [0], [1], [0, 0, 1, 1], [], []>} : vector<8x64xf32>, vector<64x256xf32>, vector<8x256xf32> -> vector<8x256xf32>
    %c6_100 = arith.constant 6 : index
    %c0_101 = arith.constant 0 : index
    %c0_102 = arith.constant 0 : index
    %286 = vector.load %arg9[%c6_100, %c0_101, %c0_102] : memref<8x8x256xf32, #tpu.memory_space<vmem>>, vector<1x8x256xf32>
    %287 = vector.shape_cast %286 : vector<1x8x256xf32> to vector<8x256xf32>
    %c1_103 = arith.constant 1 : index
    %c0_104 = arith.constant 0 : index
    %c0_105 = arith.constant 0 : index
    %288 = vector.load %arg9[%c1_103, %c0_104, %c0_105] : memref<8x8x256xf32, #tpu.memory_space<vmem>>, vector<1x8x256xf32>
    %289 = vector.shape_cast %288 : vector<1x8x256xf32> to vector<8x256xf32>
    %290 = arith.select %26, %287, %289 : vector<8x256xi1>, vector<8x256xf32>
    %291 = arith.addf %285, %290 : vector<8x256xf32>
    %292 = vector.extract_strided_slice %291 {offsets = [0, 0], sizes = [8, 64], strides = [1, 1]} : vector<8x256xf32> to vector<8x64xf32>
    %293 = arith.negf %292 : vector<8x64xf32>
    %294 = math.exp %293 : vector<8x64xf32>
    %cst_106 = arith.constant 1.000000e+00 : f32
    %295 = vector.broadcast %cst_106 : f32 to vector<8x64xf32>
    %296 = arith.addf %295, %294 : vector<8x64xf32>
    %297 = arith.divf %295, %296 : vector<8x64xf32>
    %298 = vector.extract_strided_slice %291 {offsets = [0, 64], sizes = [8, 64], strides = [1, 1]} : vector<8x256xf32> to vector<8x64xf32>
    %299 = arith.negf %298 : vector<8x64xf32>
    %300 = math.exp %299 : vector<8x64xf32>
    %cst_107 = arith.constant 1.000000e+00 : f32
    %301 = vector.broadcast %cst_107 : f32 to vector<8x64xf32>
    %302 = arith.addf %301, %300 : vector<8x64xf32>
    %303 = arith.divf %301, %302 : vector<8x64xf32>
    %304 = vector.extract_strided_slice %291 {offsets = [0, 128], sizes = [8, 64], strides = [1, 1]} : vector<8x256xf32> to vector<8x64xf32>
    %305 = math.tanh %304 : vector<8x64xf32>
    %306 = vector.extract_strided_slice %291 {offsets = [0, 192], sizes = [8, 64], strides = [1, 1]} : vector<8x256xf32> to vector<8x64xf32>
    %307 = arith.negf %306 : vector<8x64xf32>
    %308 = math.exp %307 : vector<8x64xf32>
    %cst_108 = arith.constant 1.000000e+00 : f32
    %309 = vector.broadcast %cst_108 : f32 to vector<8x64xf32>
    %310 = arith.addf %309, %308 : vector<8x64xf32>
    %311 = arith.divf %309, %310 : vector<8x64xf32>
    %312 = arith.mulf %303, %280 : vector<8x64xf32>
    %313 = arith.mulf %297, %305 : vector<8x64xf32>
    %314 = arith.addf %312, %313 : vector<8x64xf32>
    %315 = math.tanh %314 : vector<8x64xf32>
    %316 = arith.mulf %311, %315 : vector<8x64xf32>
    %c6_109 = arith.constant 6 : index
    %c0_110 = arith.constant 0 : index
    %c0_111 = arith.constant 0 : index
    %317 = vector.load %arg1[%c6_109, %c0_110, %c0_111] : memref<8x8x64xf32, #tpu.memory_space<vmem>>, vector<1x8x64xf32>
    %318 = vector.shape_cast %317 : vector<1x8x64xf32> to vector<8x64xf32>
    %319 = arith.mulf %318, %316 : vector<8x64xf32>
    %320 = arith.subf %314, %280 : vector<8x64xf32>
    %321 = arith.mulf %318, %320 : vector<8x64xf32>
    %322 = arith.addf %280, %321 : vector<8x64xf32>
    %323 = arith.subf %316, %283 : vector<8x64xf32>
    %324 = arith.mulf %318, %323 : vector<8x64xf32>
    %325 = arith.addf %283, %324 : vector<8x64xf32>
    %c0_112 = arith.constant 0 : index
    %c0_113 = arith.constant 0 : index
    %326 = vector.load %arg4[%c0_112, %c0_113] : memref<64x256xf32, #tpu.memory_space<vmem>>, vector<64x256xf32>
    %cst_114 = arith.constant dense<0.000000e+00> : vector<8x256xf32>
    %327 = tpu.matmul %325, %326, %cst_114 {dimension_numbers = #tpu.dot_dimension_numbers<[1], [0], [0], [1], [0, 0, 1, 1], [], []>} : vector<8x64xf32>, vector<64x256xf32>, vector<8x256xf32> -> vector<8x256xf32>
    %c7_115 = arith.constant 7 : index
    %c0_116 = arith.constant 0 : index
    %c0_117 = arith.constant 0 : index
    %328 = vector.load %arg9[%c7_115, %c0_116, %c0_117] : memref<8x8x256xf32, #tpu.memory_space<vmem>>, vector<1x8x256xf32>
    %329 = vector.shape_cast %328 : vector<1x8x256xf32> to vector<8x256xf32>
    %c0_118 = arith.constant 0 : index
    %c0_119 = arith.constant 0 : index
    %c0_120 = arith.constant 0 : index
    %330 = vector.load %arg9[%c0_118, %c0_119, %c0_120] : memref<8x8x256xf32, #tpu.memory_space<vmem>>, vector<1x8x256xf32>
    %331 = vector.shape_cast %330 : vector<1x8x256xf32> to vector<8x256xf32>
    %332 = arith.select %26, %329, %331 : vector<8x256xi1>, vector<8x256xf32>
    %333 = arith.addf %327, %332 : vector<8x256xf32>
    %334 = vector.extract_strided_slice %333 {offsets = [0, 0], sizes = [8, 64], strides = [1, 1]} : vector<8x256xf32> to vector<8x64xf32>
    %335 = arith.negf %334 : vector<8x64xf32>
    %336 = math.exp %335 : vector<8x64xf32>
    %cst_121 = arith.constant 1.000000e+00 : f32
    %337 = vector.broadcast %cst_121 : f32 to vector<8x64xf32>
    %338 = arith.addf %337, %336 : vector<8x64xf32>
    %339 = arith.divf %337, %338 : vector<8x64xf32>
    %340 = vector.extract_strided_slice %333 {offsets = [0, 64], sizes = [8, 64], strides = [1, 1]} : vector<8x256xf32> to vector<8x64xf32>
    %341 = arith.negf %340 : vector<8x64xf32>
    %342 = math.exp %341 : vector<8x64xf32>
    %cst_122 = arith.constant 1.000000e+00 : f32
    %343 = vector.broadcast %cst_122 : f32 to vector<8x64xf32>
    %344 = arith.addf %343, %342 : vector<8x64xf32>
    %345 = arith.divf %343, %344 : vector<8x64xf32>
    %346 = vector.extract_strided_slice %333 {offsets = [0, 128], sizes = [8, 64], strides = [1, 1]} : vector<8x256xf32> to vector<8x64xf32>
    %347 = math.tanh %346 : vector<8x64xf32>
    %348 = vector.extract_strided_slice %333 {offsets = [0, 192], sizes = [8, 64], strides = [1, 1]} : vector<8x256xf32> to vector<8x64xf32>
    %349 = arith.negf %348 : vector<8x64xf32>
    %350 = math.exp %349 : vector<8x64xf32>
    %cst_123 = arith.constant 1.000000e+00 : f32
    %351 = vector.broadcast %cst_123 : f32 to vector<8x64xf32>
    %352 = arith.addf %351, %350 : vector<8x64xf32>
    %353 = arith.divf %351, %352 : vector<8x64xf32>
    %354 = arith.mulf %345, %322 : vector<8x64xf32>
    %355 = arith.mulf %339, %347 : vector<8x64xf32>
    %356 = arith.addf %354, %355 : vector<8x64xf32>
    %357 = math.tanh %356 : vector<8x64xf32>
    %358 = arith.mulf %353, %357 : vector<8x64xf32>
    %c7_124 = arith.constant 7 : index
    %c0_125 = arith.constant 0 : index
    %c0_126 = arith.constant 0 : index
    %359 = vector.load %arg1[%c7_124, %c0_125, %c0_126] : memref<8x8x64xf32, #tpu.memory_space<vmem>>, vector<1x8x64xf32>
    %360 = vector.shape_cast %359 : vector<1x8x64xf32> to vector<8x64xf32>
    %361 = arith.mulf %360, %358 : vector<8x64xf32>
    %362 = arith.subf %358, %325 : vector<8x64xf32>
    %363 = arith.mulf %360, %362 : vector<8x64xf32>
    %364 = arith.addf %325, %363 : vector<8x64xf32>
    %365 = arith.select %29, %67, %361 : vector<8x64xi1>, vector<8x64xf32>
    %c0_127 = arith.constant 0 : index
    %c0_128 = arith.constant 0 : index
    %c0_129 = arith.constant 0 : index
    %366 = vector.load %arg7[%c0_127, %c0_128, %c0_129] : memref<8x8x64xf32, #tpu.memory_space<vmem>>, vector<1x8x64xf32>
    %367 = vector.shape_cast %366 : vector<1x8x64xf32> to vector<8x64xf32>
    %368 = vector.shape_cast %365 : vector<8x64xf32> to vector<1x8x64xf32>
    tpu.vector_store %arg7[%c0_127, %c0_128, %c0_129], %368 {strides = array<i32>} : memref<8x8x64xf32, #tpu.memory_space<vmem>>, vector<1x8x64xf32>,
    %369 = arith.select %29, %109, %319 : vector<8x64xi1>, vector<8x64xf32>
    %c1_130 = arith.constant 1 : index
    %c0_131 = arith.constant 0 : index
    %c0_132 = arith.constant 0 : index
    %370 = vector.load %arg7[%c1_130, %c0_131, %c0_132] : memref<8x8x64xf32, #tpu.memory_space<vmem>>, vector<1x8x64xf32>
    %371 = vector.shape_cast %370 : vector<1x8x64xf32> to vector<8x64xf32>
    %372 = vector.shape_cast %369 : vector<8x64xf32> to vector<1x8x64xf32>
    tpu.vector_store %arg7[%c1_130, %c0_131, %c0_132], %372 {strides = array<i32>} : memref<8x8x64xf32, #tpu.memory_space<vmem>>, vector<1x8x64xf32>,
    %373 = arith.select %29, %151, %277 : vector<8x64xi1>, vector<8x64xf32>
    %c2_133 = arith.constant 2 : index
    %c0_134 = arith.constant 0 : index
    %c0_135 = arith.constant 0 : index
    %374 = vector.load %arg7[%c2_133, %c0_134, %c0_135] : memref<8x8x64xf32, #tpu.memory_space<vmem>>, vector<1x8x64xf32>
    %375 = vector.shape_cast %374 : vector<1x8x64xf32> to vector<8x64xf32>
    %376 = vector.shape_cast %373 : vector<8x64xf32> to vector<1x8x64xf32>
    tpu.vector_store %arg7[%c2_133, %c0_134, %c0_135], %376 {strides = array<i32>} : memref<8x8x64xf32, #tpu.memory_space<vmem>>, vector<1x8x64xf32>,
    %377 = arith.select %29, %193, %235 : vector<8x64xi1>, vector<8x64xf32>
    %c3_136 = arith.constant 3 : index
    %c0_137 = arith.constant 0 : index
    %c0_138 = arith.constant 0 : index
    %378 = vector.load %arg7[%c3_136, %c0_137, %c0_138] : memref<8x8x64xf32, #tpu.memory_space<vmem>>, vector<1x8x64xf32>
    %379 = vector.shape_cast %378 : vector<1x8x64xf32> to vector<8x64xf32>
    %380 = vector.shape_cast %377 : vector<8x64xf32> to vector<1x8x64xf32>
    tpu.vector_store %arg7[%c3_136, %c0_137, %c0_138], %380 {strides = array<i32>} : memref<8x8x64xf32, #tpu.memory_space<vmem>>, vector<1x8x64xf32>,
    %381 = arith.select %29, %235, %193 : vector<8x64xi1>, vector<8x64xf32>
    %c4_139 = arith.constant 4 : index
    %c0_140 = arith.constant 0 : index
    %c0_141 = arith.constant 0 : index
    %382 = vector.load %arg7[%c4_139, %c0_140, %c0_141] : memref<8x8x64xf32, #tpu.memory_space<vmem>>, vector<1x8x64xf32>
    %383 = vector.shape_cast %382 : vector<1x8x64xf32> to vector<8x64xf32>
    %384 = vector.shape_cast %381 : vector<8x64xf32> to vector<1x8x64xf32>
    tpu.vector_store %arg7[%c4_139, %c0_140, %c0_141], %384 {strides = array<i32>} : memref<8x8x64xf32, #tpu.memory_space<vmem>>, vector<1x8x64xf32>,
    %385 = arith.select %29, %277, %151 : vector<8x64xi1>, vector<8x64xf32>
    %c5_142 = arith.constant 5 : index
    %c0_143 = arith.constant 0 : index
    %c0_144 = arith.constant 0 : index
    %386 = vector.load %arg7[%c5_142, %c0_143, %c0_144] : memref<8x8x64xf32, #tpu.memory_space<vmem>>, vector<1x8x64xf32>
    %387 = vector.shape_cast %386 : vector<1x8x64xf32> to vector<8x64xf32>
    %388 = vector.shape_cast %385 : vector<8x64xf32> to vector<1x8x64xf32>
    tpu.vector_store %arg7[%c5_142, %c0_143, %c0_144], %388 {strides = array<i32>} : memref<8x8x64xf32, #tpu.memory_space<vmem>>, vector<1x8x64xf32>,
    %389 = arith.select %29, %319, %109 : vector<8x64xi1>, vector<8x64xf32>
    %c6_145 = arith.constant 6 : index
    %c0_146 = arith.constant 0 : index
    %c0_147 = arith.constant 0 : index
    %390 = vector.load %arg7[%c6_145, %c0_146, %c0_147] : memref<8x8x64xf32, #tpu.memory_space<vmem>>, vector<1x8x64xf32>
    %391 = vector.shape_cast %390 : vector<1x8x64xf32> to vector<8x64xf32>
    %392 = vector.shape_cast %389 : vector<8x64xf32> to vector<1x8x64xf32>
    tpu.vector_store %arg7[%c6_145, %c0_146, %c0_147], %392 {strides = array<i32>} : memref<8x8x64xf32, #tpu.memory_space<vmem>>, vector<1x8x64xf32>,
    %393 = arith.select %29, %361, %67 : vector<8x64xi1>, vector<8x64xf32>
    %c7_148 = arith.constant 7 : index
    %c0_149 = arith.constant 0 : index
    %c0_150 = arith.constant 0 : index
    %394 = vector.load %arg7[%c7_148, %c0_149, %c0_150] : memref<8x8x64xf32, #tpu.memory_space<vmem>>, vector<1x8x64xf32>
    %395 = vector.shape_cast %394 : vector<1x8x64xf32> to vector<8x64xf32>
    %396 = vector.shape_cast %393 : vector<8x64xf32> to vector<1x8x64xf32>
    tpu.vector_store %arg7[%c7_148, %c0_149, %c0_150], %396 {strides = array<i32>} : memref<8x8x64xf32, #tpu.memory_space<vmem>>, vector<1x8x64xf32>,
    %c0_151 = arith.constant 0 : index
    %c0_152 = arith.constant 0 : index
    %397 = vector.load %arg5[%c0_151, %c0_152] : memref<64x16xf32, #tpu.memory_space<vmem>>, vector<64x16xf32>
    %cst_153 = arith.constant dense<0.000000e+00> : vector<8x16xf32>
    %398 = tpu.matmul %364, %397, %cst_153 {dimension_numbers = #tpu.dot_dimension_numbers<[1], [0], [0], [1], [0, 0, 1, 1], [], []>} : vector<8x64xf32>, vector<64x16xf32>, vector<8x16xf32> -> vector<8x16xf32>
    %c0_154 = arith.constant 0 : index
    %c0_155 = arith.constant 0 : index
    %399 = vector.load %arg6[%c0_154, %c0_155] : memref<1x16xf32, #tpu.memory_space<vmem>>, vector<1x16xf32>
    %400 = vector.broadcast %399 : vector<1x16xf32> to vector<8x16xf32>
    %401 = arith.addf %398, %400 : vector<8x16xf32>
    %c0_156 = arith.constant 0 : index
    %c0_157 = arith.constant 0 : index
    %402 = vector.load %arg8[%c0_156, %c0_157] : memref<8x16xf32, #tpu.memory_space<vmem>>, vector<8x16xf32>
    tpu.vector_store %arg8[%c0_156, %c0_157], %401 {strides = array<i32>} : memref<8x16xf32, #tpu.memory_space<vmem>>, vector<8x16xf32>,
    return
  }
}

</mosaic_0001>

<llo_original>
// kernel: basic_encoder_forward.1
$region0: #{basic_encoder_forward.1}
  #allocation0 [shape = 'u32[]', space=smem, size = 0x4, offset = 0x4, fixed_abs, tag = 'smem constant byte address 0x4 - core index']
  #allocation1 [shape = 'u32[72,128]{1,0:T(1,128)}', space=vmem, size = 0x9000, scoped, tag = 'internal scratch']
  #allocation2 [shape = 'f32[8,8,256]{2,1,0:T(8,128)}', space=vmem, size = 0x10000, scoped, tag = 'scratch operand']
  %s0 = inlined_call_operand.vmem [shape: f32[64,32], index: 0, kind: input, shape index: {}]
  %s1 = inlined_call_operand.vmem [shape: f32[8,8,64], index: 1, kind: input, shape index: {}]
  %s2 = inlined_call_operand.vmem [shape: f32[32,256], index: 2, kind: input, shape index: {}]
  %s3 = inlined_call_operand.vmem [shape: f32[1,256], index: 3, kind: input, shape index: {}]
  %s4 = inlined_call_operand.vmem [shape: f32[64,256], index: 4, kind: input, shape index: {}]
  %s5 = inlined_call_operand.vmem [shape: f32[64,16], index: 5, kind: input, shape index: {}]
  %s6 = inlined_call_operand.vmem [shape: f32[1,16], index: 6, kind: input, shape index: {}]
  %s7 = inlined_call_operand.vmem [shape: f32[8,8,64], index: 7, kind: output, shape index: {0}]
  %s8 = inlined_call_operand.vmem [shape: f32[8,16], index: 8, kind: output, shape index: {1}]
  %9 = xla_tuple %s7, %s8
  %s10 = sld [smem:[#allocation0]]
  $region46: #{basic_encoder_forward.1} parent=0
    _
  %s12 = ssub.s32 1, %s10
  %s13 = scalar_select 0, %s12, %s10
  // Predicated region
  $region2: #{basic_encoder_forward.1} parent=0 // pred_check
    _
  $region3: #{basic_encoder_forward.1} parent=0 // pred_check_branch
    %15 = sbr.rel (0) target = $region5
  $region4: #{basic_encoder_forward.1} parent=0 // pred_region
    _
  $region5: #{basic_encoder_forward.1} parent=0 // pred_fallthru
    _
  // Predicated region
  $region6: #{basic_encoder_forward.1} parent=0 // pred_check
    _
  $region7: #{basic_encoder_forward.1} parent=0 // pred_check_branch
    %17 = sbr.rel (0) target = $region9
  $region8: #{basic_encoder_forward.1} parent=0 // pred_region
    _
  $region9: #{basic_encoder_forward.1} parent=0 // pred_fallthru
    _
  // Predicated region
  $region10: #{basic_encoder_forward.1} parent=0 // pred_check
    _
  $region11: #{basic_encoder_forward.1} parent=0 // pred_check_branch
    %19 = sbr.rel (0) target = $region13
  $region12: #{basic_encoder_forward.1} parent=0 // pred_region
    _
  $region13: #{basic_encoder_forward.1} parent=0 // pred_fallthru
    _
  // Predicated region
  $region14: #{basic_encoder_forward.1} parent=0 // pred_check
    _
  $region15: #{basic_encoder_forward.1} parent=0 // pred_check_branch
    %21 = sbr.rel (0) target = $region17
  $region16: #{basic_encoder_forward.1} parent=0 // pred_region
    _
  $region17: #{basic_encoder_forward.1} parent=0 // pred_fallthru
    _
  // Predicated region
  $region18: #{basic_encoder_forward.1} parent=0 // pred_check
    _
  $region19: #{basic_encoder_forward.1} parent=0 // pred_check_branch
    %23 = sbr.rel (0) target = $region21
  $region20: #{basic_encoder_forward.1} parent=0 // pred_region
    _
  $region21: #{basic_encoder_forward.1} parent=0 // pred_fallthru
    _
  // Predicated region
  $region22: #{basic_encoder_forward.1} parent=0 // pred_check
    _
  $region23: #{basic_encoder_forward.1} parent=0 // pred_check_branch
    %25 = sbr.rel (0) target = $region25
  $region24: #{basic_encoder_forward.1} parent=0 // pred_region
    _
  $region25: #{basic_encoder_forward.1} parent=0 // pred_fallthru
    _
  // Predicated region
  $region26: #{basic_encoder_forward.1} parent=0 // pred_check
    _
  $region27: #{basic_encoder_forward.1} parent=0 // pred_check_branch
    %27 = sbr.rel (0) target = $region29
  $region28: #{basic_encoder_forward.1} parent=0 // pred_region
    _
  $region29: #{basic_encoder_forward.1} parent=0 // pred_fallthru
    _
  %v28 = vld [vmem:[%s0] sm:$0xff]
  %v29 = vld [vmem:[%s0 + $0x8] sm:$0xff]
  %v30 = vld [vmem:[%s0 + $0x10] sm:$0xff]
  %v31 = vld [vmem:[%s0 + $0x18] sm:$0xff]
  %v32 = vld [vmem:[%s0 + $0x20] sm:$0xff]
  %v33 = vld [vmem:[%s0 + $0x28] sm:$0xff]
  %v34 = vld [vmem:[%s0 + $0x30] sm:$0xff]
  %v35 = vld [vmem:[%s0 + $0x38] sm:$0xff]
  %v36 = vld [vmem:[%s2] sm:$0xff]
  %v37 = vld [vmem:[%s2 + $0x8] sm:$0xff]
  %v38 = vld [vmem:[%s2 + $0x10] sm:$0xff]
  %v39 = vld [vmem:[%s2 + $0x18] sm:$0xff]
  %v40 = vld [vmem:[%s2 + $0x20] sm:$0xff]
  %v41 = vld [vmem:[%s2 + $0x28] sm:$0xff]
  %v42 = vld [vmem:[%s2 + $0x30] sm:$0xff]
  %v43 = vld [vmem:[%s2 + $0x38] sm:$0xff]
  %v44 = vld [vmem:[%s3] sm:$0x3]
  %v46 = vperm.slane %v44, 0
  %v47 = vperm.slane %v44, 1
  %vm50 = vcmask 261120
  %v52 = vsel %vm50, %v28, 0
  %v55 = vsel %vm50, %v29, 0
  %v58 = vsel %vm50, %v30, 0
  %v61 = vsel %vm50, %v31, 0
  %v64 = vsel %vm50, %v32, 0
  %v67 = vsel %vm50, %v33, 0
  %v70 = vsel %vm50, %v34, 0
  %v73 = vsel %vm50, %v35, 0
  %75 = vmatpush.msra.mxu0 0.0
  %76 = vmatpush.msra.mxu0 0.0
  %77 = vmatpush.msra.mxu0 0.0
  %78 = vmatpush.msra.mxu0 0.0
  %79 = vmatpush.msra.mxu0 0.0
  %80 = vmatpush.msra.mxu0 0.0
  %81 = vmatpush.msra.mxu0 0.0
  %82 = vmatpush.msra.mxu0 0.0
  %83 = vmatpush.msra.mxu0 0.0
  %84 = vmatpush.msra.mxu0 0.0
  %85 = vmatpush.msra.mxu0 0.0
  %86 = vmatpush.msra.mxu0 0.0
  %87 = vmatpush.msra.mxu0 %v42
  %88 = vmatpush.msra.mxu0 %v40
  %89 = vmatpush.msra.mxu0 %v38
  %90 = vmatpush.msra.mxu0 %v36
  %91 = vmatmul.f32.gmra.mxu0 %v52
  %v92 = vpop.f32.mrf.mxu0
  %v93 = vadd.f32 %v46, %v92
  %94 = vmatmul.f32.gmra.mxu0 %v55
  %v95 = vpop.f32.mrf.mxu0
  %v96 = vadd.f32 %v46, %v95
  %97 = vmatmul.f32.gmra.mxu0 %v58
  %v98 = vpop.f32.mrf.mxu0
  %v99 = vadd.f32 %v46, %v98
  %100 = vmatmul.f32.gmra.mxu0 %v61
  %v101 = vpop.f32.mrf.mxu0
  %v102 = vadd.f32 %v46, %v101
  %103 = vmatmul.f32.gmra.mxu0 %v64
  %v104 = vpop.f32.mrf.mxu0
  %v105 = vadd.f32 %v46, %v104
  %106 = vmatmul.f32.gmra.mxu0 %v67
  %v107 = vpop.f32.mrf.mxu0
  %v108 = vadd.f32 %v46, %v107
  %109 = vmatmul.f32.gmra.mxu0 %v70
  %v110 = vpop.f32.mrf.mxu0
  %v111 = vadd.f32 %v46, %v110
  %112 = vmatmul.f32.gmra.mxu0 %v73
  %v113 = vpop.f32.mrf.mxu0
  %v114 = vadd.f32 %v46, %v113
  %115 = vdwg.mxu0
  %116 = vmatpush.msra.mxu0 0.0
  %117 = vmatpush.msra.mxu0 0.0
  %118 = vmatpush.msra.mxu0 0.0
  %119 = vmatpush.msra.mxu0 0.0
  %120 = vmatpush.msra.mxu0 0.0
  %121 = vmatpush.msra.mxu0 0.0
  %122 = vmatpush.msra.mxu0 0.0
  %123 = vmatpush.msra.mxu0 0.0
  %124 = vmatpush.msra.mxu0 0.0
  %125 = vmatpush.msra.mxu0 0.0
  %126 = vmatpush.msra.mxu0 0.0
  %127 = vmatpush.msra.mxu0 0.0
  %128 = vmatpush.msra.mxu0 %v43
  %129 = vmatpush.msra.mxu0 %v41
  %130 = vmatpush.msra.mxu0 %v39
  %131 = vmatpush.msra.mxu0 %v37
  %132 = vmatmul.f32.gmra.mxu0 %v52
  %v133 = vpop.f32.mrf.mxu0
  %v134 = vadd.f32 %v47, %v133
  %135 = vmatmul.f32.gmra.mxu0 %v55
  %v136 = vpop.f32.mrf.mxu0
  %v137 = vadd.f32 %v47, %v136
  %138 = vmatmul.f32.gmra.mxu0 %v58
  %v139 = vpop.f32.mrf.mxu0
  %v140 = vadd.f32 %v47, %v139
  %141 = vmatmul.f32.gmra.mxu0 %v61
  %v142 = vpop.f32.mrf.mxu0
  %v143 = vadd.f32 %v47, %v142
  %144 = vmatmul.f32.gmra.mxu0 %v64
  %v145 = vpop.f32.mrf.mxu0
  %v146 = vadd.f32 %v47, %v145
  %147 = vmatmul.f32.gmra.mxu0 %v67
  %v148 = vpop.f32.mrf.mxu0
  %v149 = vadd.f32 %v47, %v148
  %150 = vmatmul.f32.gmra.mxu0 %v70
  %v151 = vpop.f32.mrf.mxu0
  %v152 = vadd.f32 %v47, %v151
  %153 = vmatmul.f32.gmra.mxu0 %v73
  %v154 = vpop.f32.mrf.mxu0
  %v155 = vadd.f32 %v47, %v154
  %156 = vdwg.mxu0
  %157 = vst [vmem:[#allocation2] sm:$0xff] %v93
  %158 = vst [vmem:[#allocation2 + $0x8] sm:$0xff] %v134
  %159 = vst [vmem:[#allocation2 + $0x10] sm:$0xff] %v96
  %160 = vst [vmem:[#allocation2 + $0x18] sm:$0xff] %v137
  %161 = vst [vmem:[#allocation2 + $0x20] sm:$0xff] %v99
  %162 = vst [vmem:[#allocation2 + $0x28] sm:$0xff] %v140
  %163 = vst [vmem:[#allocation2 + $0x30] sm:$0xff] %v102
  %164 = vst [vmem:[#allocation2 + $0x38] sm:$0xff] %v143
  %165 = vst [vmem:[#allocation2 + $0x40] sm:$0xff] %v105
  %166 = vst [vmem:[#allocation2 + $0x48] sm:$0xff] %v146
  %167 = vst [vmem:[#allocation2 + $0x50] sm:$0xff] %v108
  %168 = vst [vmem:[#allocation2 + $0x58] sm:$0xff] %v149
  %169 = vst [vmem:[#allocation2 + $0x60] sm:$0xff] %v111
  %170 = vst [vmem:[#allocation2 + $0x68] sm:$0xff] %v152
  %171 = vst [vmem:[#allocation2 + $0x70] sm:$0xff] %v114
  %172 = vst [vmem:[#allocation2 + $0x78] sm:$0xff] %v155
  %v173 = vlaneseq
  %v174 = vand.u32 %v173, 127
  %v175 = vadd.s32 %v174, 128
  %vm176 = vcmp.lt.s32.totalorder %v174, 0
  %v177 = vsub.s32 0, %v174
  %v178 = vsel %vm176, %v177, %v174
  %v179 = vshrl.u32 %v178, 6
  %v180 = vand.u32 %v178, 63
  %v181 = vsub.s32 0, %v180
  %v182 = vsel %vm176, %v181, %v180
  %vm183 = vcmp.lt.s32.totalorder %v175, 0
  %v184 = vsub.s32 0, %v175
  %v185 = vsel %vm183, %v184, %v175
  %v186 = vshrl.u32 %v185, 6
  %v187 = vand.u32 %v185, 63
  %v188 = vsub.s32 0, %v187
  %v189 = vsel %vm183, %v188, %v187
  %vm190 = vcmp.ne.s32.totalorder %v182, 0
  %vm191 = vcmp.ne.s32.totalorder %v189, 0
  %vm192 = vcmp.lt.s32.totalorder %v182, 0
  %vm193 = vcmp.lt.s32.totalorder %v189, 0
  %vm194 = vmand %vm192, %vm190
  %vm195 = vmand %vm193, %vm191
  %v196 = vadd.s32 %v182, 64
  %v197 = vadd.s32 %v189, 64
  %v198 = vsel %vm194, %v196, %v182
  %v199 = vsel %vm195, %v197, %v189
  %vm200 = vcmp.lt.s32.totalorder %v198, 32
  %vm201 = vcmp.lt.s32.totalorder %v199, 32
  %vm202 = vcmp.lt.s32.totalorder %v174, 32
  %v203 = vld [vmem:[%s4] sm:$0xff]
  %v204 = vld [vmem:[%s4 + $0x8] sm:$0xff]
  %v205 = vld [vmem:[%s4 + $0x10] sm:$0xff]
  %v206 = vld [vmem:[%s4 + $0x18] sm:$0xff]
  %v207 = vld [vmem:[%s4 + $0x20] sm:$0xff]
  %v208 = vld [vmem:[%s4 + $0x28] sm:$0xff]
  %v209 = vld [vmem:[%s4 + $0x30] sm:$0xff]
  %v210 = vld [vmem:[%s4 + $0x38] sm:$0xff]
  %v211 = vld [vmem:[%s4 + $0x40] sm:$0xff]
  %v212 = vld [vmem:[%s4 + $0x48] sm:$0xff]
  %v213 = vld [vmem:[%s4 + $0x50] sm:$0xff]
  %v214 = vld [vmem:[%s4 + $0x58] sm:$0xff]
  %v215 = vld [vmem:[%s4 + $0x60] sm:$0xff]
  %v216 = vld [vmem:[%s4 + $0x68] sm:$0xff]
  %v217 = vld [vmem:[%s4 + $0x70] sm:$0xff]
  %v218 = vld [vmem:[%s4 + $0x78] sm:$0xff]
  %v219 = vld [vmem:[#allocation2] sm:$0xff]
  %v220 = vld [vmem:[#allocation2 + $0x8] sm:$0xff]
  %s221 = scalar_lea.vmem [#allocation2], 112
  %v222 = vld [vmem:[%s221] sm:$0xff]
  %v223 = vld [vmem:[%s221 + $0x8] sm:$0xff]
  %v224 = vsel %vm200, %v219, %v222
  %v225 = vsel %vm201, %v220, %v223
  %vm226 = vcmask 523264
  %v228 = vsel %vm226, 0.0, 0
  %230 = vmatpush.msra.mxu0 0.0
  %231 = vmatpush.msra.mxu0 0.0
  %232 = vmatpush.msra.mxu0 0.0
  %233 = vmatpush.msra.mxu0 0.0
  %234 = vmatpush.msra.mxu0 0.0
  %235 = vmatpush.msra.mxu0 0.0
  %236 = vmatpush.msra.mxu0 0.0
  %237 = vmatpush.msra.mxu0 0.0
  %238 = vmatpush.msra.mxu0 %v217
  %239 = vmatpush.msra.mxu0 %v215
  %240 = vmatpush.msra.mxu0 %v213
  %241 = vmatpush.msra.mxu0 %v211
  %242 = vmatpush.msra.mxu0 %v209
  %243 = vmatpush.msra.mxu0 %v207
  %244 = vmatpush.msra.mxu0 %v205
  %245 = vmatpush.msra.mxu0 %v203
  %246 = vmatmul.f32.gmra.mxu0 %v228
  %v247 = vpop.f32.mrf.mxu0
  %v248 = vadd.f32 %v224, %v247
  %249 = vdwg.mxu0
  %250 = vmatpush.msra.mxu0 0.0
  %251 = vmatpush.msra.mxu0 0.0
  %252 = vmatpush.msra.mxu0 0.0
  %253 = vmatpush.msra.mxu0 0.0
  %254 = vmatpush.msra.mxu0 0.0
  %255 = vmatpush.msra.mxu0 0.0
  %256 = vmatpush.msra.mxu0 0.0
  %257 = vmatpush.msra.mxu0 0.0
  %258 = vmatpush.msra.mxu0 %v218
  %259 = vmatpush.msra.mxu0 %v216
  %260 = vmatpush.msra.mxu0 %v214
  %261 = vmatpush.msra.mxu0 %v212
  %262 = vmatpush.msra.mxu0 %v210
  %263 = vmatpush.msra.mxu0 %v208
  %264 = vmatpush.msra.mxu0 %v206
  %265 = vmatpush.msra.mxu0 %v204
  %266 = vmatmul.f32.gmra.mxu0 %v228
  %v267 = vpop.f32.mrf.mxu0
  %v268 = vadd.f32 %v225, %v267
  %269 = vdwg.mxu0
  %v270 = vxor.u32 %v248, 2147483648
  %v271 = vmul.f32 %v270, 1.442695
  %v272 = vpow.pop %v271
  %v273 = vadd.f32 %v272, 1.0
  %v274 = vrcp.pop %v273
  %v275 = vmul.f32 %v273, %v274
  %v276 = vsub.f32 1.0, %v275
  %v277 = vmul.f32 %v274, %v276
  %v278 = vadd.f32 %v274, %v277
  %vm279 = vweird.f32 %v273
  %vm280 = vweird.f32 %v274
  %vm281 = vmor %vm279, %vm280
  %v282 = vsel %vm281, %v274, %v278
  %v283 = vand.u32 2147483647, %v273
  %vm284 = vcmp.eq.f32.partialorder %v283, 8.507059e+37
  %v285 = vand.u32 %v273, 2147483648
  %v286 = vor.u32 1.1754944e-38, %v285
  %v287 = vsel %vm284, %v286, %v282
  %v288 = vmul.f32 1.0, %v287
  %v289 = vtanh.pop %v268
  %v290 = vxor.u32 %v268, 2147483648
  %v291 = vmul.f32 %v290, 1.442695
  %v292 = vpow.pop %v291
  %v293 = vadd.f32 %v292, 1.0
  %v294 = vrcp.pop %v293
  %v295 = vmul.f32 %v293, %v294
  %v296 = vsub.f32 1.0, %v295
  %v297 = vmul.f32 %v294, %v296
  %v298 = vadd.f32 %v294, %v297
  %vm299 = vweird.f32 %v293
  %vm300 = vweird.f32 %v294
  %vm301 = vmor %vm299, %vm300
  %v302 = vsel %vm301, %v294, %v298
  %v303 = vand.u32 2147483647, %v293
  %vm304 = vcmp.eq.f32.partialorder %v303, 8.507059e+37
  %v305 = vand.u32 %v293, 2147483648
  %v306 = vor.u32 1.1754944e-38, %v305
  %v307 = vsel %vm304, %v306, %v302
  %v308 = vmul.f32 1.0, %v307
  %v309 = vmul.f32 %v288, 0.0
  %v310 = vmul.f32 %v288, %v289
  %312 = vrot.lane.b32.xlu0 %v310, 64
  %v313 = vpop.permute.xlu0 %312
  %v315 = vadd.f32 %v309, %v313
  %v316 = vtanh.pop %v315
  %v317 = vmul.f32 %v308, %v316
  %v318 = vld [vmem:[%s1] sm:$0xff]
  %320 = vrot.lane.b32.xlu0 %v317, 64
  %v321 = vpop.permute.xlu0 %320
  %v323 = vmul.f32 %v318, %v321
  %325 = vrot.lane.b32.xlu0 %v315, 64
  %v326 = vpop.permute.xlu0 %325
  %v328 = vmul.f32 %v318, %v326
  %v329 = vadd.f32 %v328, 0.0
  %v330 = vadd.f32 %v323, 0.0
  %s331 = scalar_lea.vmem [#allocation2], 16
  %v332 = vld [vmem:[%s331] sm:$0xff]
  %v333 = vld [vmem:[%s331 + $0x8] sm:$0xff]
  %s334 = scalar_lea.vmem [#allocation2], 96
  %v335 = vld [vmem:[%s334] sm:$0xff]
  %v336 = vld [vmem:[%s334 + $0x8] sm:$0xff]
  %v337 = vsel %vm200, %v332, %v335
  %v338 = vsel %vm201, %v333, %v336
  %v340 = vsel %vm226, %v330, 0
  %342 = vmatpush.msra.mxu0 0.0
  %343 = vmatpush.msra.mxu0 0.0
  %344 = vmatpush.msra.mxu0 0.0
  %345 = vmatpush.msra.mxu0 0.0
  %346 = vmatpush.msra.mxu0 0.0
  %347 = vmatpush.msra.mxu0 0.0
  %348 = vmatpush.msra.mxu0 0.0
  %349 = vmatpush.msra.mxu0 0.0
  %350 = vmatpush.msra.mxu0 %v217
  %351 = vmatpush.msra.mxu0 %v215
  %352 = vmatpush.msra.mxu0 %v213
  %353 = vmatpush.msra.mxu0 %v211
  %354 = vmatpush.msra.mxu0 %v209
  %355 = vmatpush.msra.mxu0 %v207
  %356 = vmatpush.msra.mxu0 %v205
  %357 = vmatpush.msra.mxu0 %v203
  %358 = vmatmul.f32.gmra.mxu0 %v340
  %v359 = vpop.f32.mrf.mxu0
  %v360 = vadd.f32 %v337, %v359
  %361 = vdwg.mxu0
  %362 = vmatpush.msra.mxu0 0.0
  %363 = vmatpush.msra.mxu0 0.0
  %364 = vmatpush.msra.mxu0 0.0
  %365 = vmatpush.msra.mxu0 0.0
  %366 = vmatpush.msra.mxu0 0.0
  %367 = vmatpush.msra.mxu0 0.0
  %368 = vmatpush.msra.mxu0 0.0
  %369 = vmatpush.msra.mxu0 0.0
  %370 = vmatpush.msra.mxu0 %v218
  %371 = vmatpush.msra.mxu0 %v216
  %372 = vmatpush.msra.mxu0 %v214
  %373 = vmatpush.msra.mxu0 %v212
  %374 = vmatpush.msra.mxu0 %v210
  %375 = vmatpush.msra.mxu0 %v208
  %376 = vmatpush.msra.mxu0 %v206
  %377 = vmatpush.msra.mxu0 %v204
  %378 = vmatmul.f32.gmra.mxu0 %v340
  %v379 = vpop.f32.mrf.mxu0
  %v380 = vadd.f32 %v338, %v379
  %381 = vdwg.mxu0
  %v382 = vxor.u32 %v360, 2147483648
  %v383 = vmul.f32 %v382, 1.442695
  %v384 = vpow.pop %v383
  %v385 = vadd.f32 %v384, 1.0
  %v386 = vrcp.pop %v385
  %v387 = vmul.f32 %v385, %v386
  %v388 = vsub.f32 1.0, %v387
  %v389 = vmul.f32 %v386, %v388
  %v390 = vadd.f32 %v386, %v389
  %vm391 = vweird.f32 %v385
  %vm392 = vweird.f32 %v386
  %vm393 = vmor %vm391, %vm392
  %v394 = vsel %vm393, %v386, %v390
  %v395 = vand.u32 2147483647, %v385
  %vm396 = vcmp.eq.f32.partialorder %v395, 8.507059e+37
  %v397 = vand.u32 %v385, 2147483648
  %v398 = vor.u32 1.1754944e-38, %v397
  %v399 = vsel %vm396, %v398, %v394
  %v400 = vmul.f32 1.0, %v399
  %v401 = vtanh.pop %v380
  %v402 = vxor.u32 %v380, 2147483648
  %v403 = vmul.f32 %v402, 1.442695
  %v404 = vpow.pop %v403
  %v405 = vadd.f32 %v404, 1.0
  %v406 = vrcp.pop %v405
  %v407 = vmul.f32 %v405, %v406
  %v408 = vsub.f32 1.0, %v407
  %v409 = vmul.f32 %v406, %v408
  %v410 = vadd.f32 %v406, %v409
  %vm411 = vweird.f32 %v405
  %vm412 = vweird.f32 %v406
  %vm413 = vmor %vm411, %vm412
  %v414 = vsel %vm413, %v406, %v410
  %v415 = vand.u32 2147483647, %v405
  %vm416 = vcmp.eq.f32.partialorder %v415, 8.507059e+37
  %v417 = vand.u32 %v405, 2147483648
  %v418 = vor.u32 1.1754944e-38, %v417
  %v419 = vsel %vm416, %v418, %v414
  %v420 = vmul.f32 1.0, %v419
  %422 = vrot.lane.b32.xlu0 %v329, 64
  %v423 = vpop.permute.xlu0 %422
  %v425 = vmul.f32 %v400, %v423
  %v426 = vmul.f32 %v400, %v401
  %428 = vrot.lane.b32.xlu0 %v426, 64
  %v429 = vpop.permute.xlu0 %428
  %v431 = vadd.f32 %v425, %v429
  %v432 = vtanh.pop %v431
  %v433 = vmul.f32 %v420, %v432
  %s434 = scalar_lea.vmem %s1, 8
  %v435 = vld [vmem:[%s434] sm:$0xff]
  %437 = vrot.lane.b32.xlu0 %v433, 64
  %v438 = vpop.permute.xlu0 %437
  %v440 = vmul.f32 %v435, %v438
  %v441 = vsub.f32 %v431, %v423
  %443 = vrot.lane.b32.xlu0 %v441, 64
  %v444 = vpop.permute.xlu0 %443
  %v446 = vmul.f32 %v435, %v444
  %v447 = vadd.f32 %v329, %v446
  %448 = vrot.lane.b32.xlu0 %v330, 64
  %v449 = vpop.permute.xlu0 %448
  %v451 = vsub.f32 %v433, %v449
  %453 = vrot.lane.b32.xlu0 %v451, 64
  %v454 = vpop.permute.xlu0 %453
  %v456 = vmul.f32 %v435, %v454
  %v457 = vadd.f32 %v330, %v456
  %s458 = scalar_lea.vmem [#allocation2], 32
  %v459 = vld [vmem:[%s458] sm:$0xff]
  %v460 = vld [vmem:[%s458 + $0x8] sm:$0xff]
  %s461 = scalar_lea.vmem [#allocation2], 80
  %v462 = vld [vmem:[%s461] sm:$0xff]
  %v463 = vld [vmem:[%s461 + $0x8] sm:$0xff]
  %v464 = vsel %vm200, %v459, %v462
  %v465 = vsel %vm201, %v460, %v463
  %v467 = vsel %vm226, %v457, 0
  %469 = vmatpush.msra.mxu0 0.0
  %470 = vmatpush.msra.mxu0 0.0
  %471 = vmatpush.msra.mxu0 0.0
  %472 = vmatpush.msra.mxu0 0.0
  %473 = vmatpush.msra.mxu0 0.0
  %474 = vmatpush.msra.mxu0 0.0
  %475 = vmatpush.msra.mxu0 0.0
  %476 = vmatpush.msra.mxu0 0.0
  %477 = vmatpush.msra.mxu0 %v217
  %478 = vmatpush.msra.mxu0 %v215
  %479 = vmatpush.msra.mxu0 %v213
  %480 = vmatpush.msra.mxu0 %v211
  %481 = vmatpush.msra.mxu0 %v209
  %482 = vmatpush.msra.mxu0 %v207
  %483 = vmatpush.msra.mxu0 %v205
  %484 = vmatpush.msra.mxu0 %v203
  %485 = vmatmul.f32.gmra.mxu0 %v467
  %v486 = vpop.f32.mrf.mxu0
  %v487 = vadd.f32 %v464, %v486
  %488 = vdwg.mxu0
  %489 = vmatpush.msra.mxu0 0.0
  %490 = vmatpush.msra.mxu0 0.0
  %491 = vmatpush.msra.mxu0 0.0
  %492 = vmatpush.msra.mxu0 0.0
  %493 = vmatpush.msra.mxu0 0.0
  %494 = vmatpush.msra.mxu0 0.0
  %495 = vmatpush.msra.mxu0 0.0
  %496 = vmatpush.msra.mxu0 0.0
  %497 = vmatpush.msra.mxu0 %v218
  %498 = vmatpush.msra.mxu0 %v216
  %499 = vmatpush.msra.mxu0 %v214
  %500 = vmatpush.msra.mxu0 %v212
  %501 = vmatpush.msra.mxu0 %v210
  %502 = vmatpush.msra.mxu0 %v208
  %503 = vmatpush.msra.mxu0 %v206
  %504 = vmatpush.msra.mxu0 %v204
  %505 = vmatmul.f32.gmra.mxu0 %v467
  %v506 = vpop.f32.mrf.mxu0
  %v507 = vadd.f32 %v465, %v506
  %508 = vdwg.mxu0
  %v509 = vxor.u32 %v487, 2147483648
  %v510 = vmul.f32 %v509, 1.442695
  %v511 = vpow.pop %v510
  %v512 = vadd.f32 %v511, 1.0
  %v513 = vrcp.pop %v512
  %v514 = vmul.f32 %v512, %v513
  %v515 = vsub.f32 1.0, %v514
  %v516 = vmul.f32 %v513, %v515
  %v517 = vadd.f32 %v513, %v516
  %vm518 = vweird.f32 %v512
  %vm519 = vweird.f32 %v513
  %vm520 = vmor %vm518, %vm519
  %v521 = vsel %vm520, %v513, %v517
  %v522 = vand.u32 2147483647, %v512
  %vm523 = vcmp.eq.f32.partialorder %v522, 8.507059e+37
  %v524 = vand.u32 %v512, 2147483648
  %v525 = vor.u32 1.1754944e-38, %v524
  %v526 = vsel %vm523, %v525, %v521
  %v527 = vmul.f32 1.0, %v526
  %v528 = vtanh.pop %v507
  %v529 = vxor.u32 %v507, 2147483648
  %v530 = vmul.f32 %v529, 1.442695
  %v531 = vpow.pop %v530
  %v532 = vadd.f32 %v531, 1.0
  %v533 = vrcp.pop %v532
  %v534 = vmul.f32 %v532, %v533
  %v535 = vsub.f32 1.0, %v534
  %v536 = vmul.f32 %v533, %v535
  %v537 = vadd.f32 %v533, %v536
  %vm538 = vweird.f32 %v532
  %vm539 = vweird.f32 %v533
  %vm540 = vmor %vm538, %vm539
  %v541 = vsel %vm540, %v533, %v537
  %v542 = vand.u32 2147483647, %v532
  %vm543 = vcmp.eq.f32.partialorder %v542, 8.507059e+37
  %v544 = vand.u32 %v532, 2147483648
  %v545 = vor.u32 1.1754944e-38, %v544
  %v546 = vsel %vm543, %v545, %v541
  %v547 = vmul.f32 1.0, %v546
  %549 = vrot.lane.b32.xlu0 %v447, 64
  %v550 = vpop.permute.xlu0 %549
  %v552 = vmul.f32 %v527, %v550
  %v553 = vmul.f32 %v527, %v528
  %555 = vrot.lane.b32.xlu0 %v553, 64
  %v556 = vpop.permute.xlu0 %555
  %v558 = vadd.f32 %v552, %v556
  %v559 = vtanh.pop %v558
  %v560 = vmul.f32 %v547, %v559
  %s561 = scalar_lea.vmem %s1, 16
  %v562 = vld [vmem:[%s561] sm:$0xff]
  %564 = vrot.lane.b32.xlu0 %v560, 64
  %v565 = vpop.permute.xlu0 %564
  %v567 = vmul.f32 %v562, %v565
  %v568 = vsub.f32 %v558, %v550
  %570 = vrot.lane.b32.xlu0 %v568, 64
  %v571 = vpop.permute.xlu0 %570
  %v573 = vmul.f32 %v562, %v571
  %v574 = vadd.f32 %v447, %v573
  %575 = vrot.lane.b32.xlu0 %v457, 64
  %v576 = vpop.permute.xlu0 %575
  %v578 = vsub.f32 %v560, %v576
  %580 = vrot.lane.b32.xlu0 %v578, 64
  %v581 = vpop.permute.xlu0 %580
  %v583 = vmul.f32 %v562, %v581
  %v584 = vadd.f32 %v457, %v583
  %s585 = scalar_lea.vmem [#allocation2], 48
  %v586 = vld [vmem:[%s585] sm:$0xff]
  %v587 = vld [vmem:[%s585 + $0x8] sm:$0xff]
  %s588 = scalar_lea.vmem [#allocation2], 64
  %v589 = vld [vmem:[%s588] sm:$0xff]
  %v590 = vld [vmem:[%s588 + $0x8] sm:$0xff]
  %v591 = vsel %vm200, %v586, %v589
  %v592 = vsel %vm201, %v587, %v590
  %v594 = vsel %vm226, %v584, 0
  %596 = vmatpush.msra.mxu0 0.0
  %597 = vmatpush.msra.mxu0 0.0
  %598 = vmatpush.msra.mxu0 0.0
  %599 = vmatpush.msra.mxu0 0.0
  %600 = vmatpush.msra.mxu0 0.0
  %601 = vmatpush.msra.mxu0 0.0
  %602 = vmatpush.msra.mxu0 0.0
  %603 = vmatpush.msra.mxu0 0.0
  %604 = vmatpush.msra.mxu0 %v217
  %605 = vmatpush.msra.mxu0 %v215
  %606 = vmatpush.msra.mxu0 %v213
  %607 = vmatpush.msra.mxu0 %v211
  %608 = vmatpush.msra.mxu0 %v209
  %609 = vmatpush.msra.mxu0 %v207
  %610 = vmatpush.msra.mxu0 %v205
  %611 = vmatpush.msra.mxu0 %v203
  %612 = vmatmul.f32.gmra.mxu0 %v594
  %v613 = vpop.f32.mrf.mxu0
  %v614 = vadd.f32 %v591, %v613
  %615 = vdwg.mxu0
  %616 = vmatpush.msra.mxu0 0.0
  %617 = vmatpush.msra.mxu0 0.0
  %618 = vmatpush.msra.mxu0 0.0
  %619 = vmatpush.msra.mxu0 0.0
  %620 = vmatpush.msra.mxu0 0.0
  %621 = vmatpush.msra.mxu0 0.0
  %622 = vmatpush.msra.mxu0 0.0
  %623 = vmatpush.msra.mxu0 0.0
  %624 = vmatpush.msra.mxu0 %v218
  %625 = vmatpush.msra.mxu0 %v216
  %626 = vmatpush.msra.mxu0 %v214
  %627 = vmatpush.msra.mxu0 %v212
  %628 = vmatpush.msra.mxu0 %v210
  %629 = vmatpush.msra.mxu0 %v208
  %630 = vmatpush.msra.mxu0 %v206
  %631 = vmatpush.msra.mxu0 %v204
  %632 = vmatmul.f32.gmra.mxu0 %v594
  %v633 = vpop.f32.mrf.mxu0
  %v634 = vadd.f32 %v592, %v633
  %635 = vdwg.mxu0
  %v636 = vxor.u32 %v614, 2147483648
  %v637 = vmul.f32 %v636, 1.442695
  %v638 = vpow.pop %v637
  %v639 = vadd.f32 %v638, 1.0
  %v640 = vrcp.pop %v639
  %v641 = vmul.f32 %v639, %v640
  %v642 = vsub.f32 1.0, %v641
  %v643 = vmul.f32 %v640, %v642
  %v644 = vadd.f32 %v640, %v643
  %vm645 = vweird.f32 %v639
  %vm646 = vweird.f32 %v640
  %vm647 = vmor %vm645, %vm646
  %v648 = vsel %vm647, %v640, %v644
  %v649 = vand.u32 2147483647, %v639
  %vm650 = vcmp.eq.f32.partialorder %v649, 8.507059e+37
  %v651 = vand.u32 %v639, 2147483648
  %v652 = vor.u32 1.1754944e-38, %v651
  %v653 = vsel %vm650, %v652, %v648
  %v654 = vmul.f32 1.0, %v653
  %v655 = vtanh.pop %v634
  %v656 = vxor.u32 %v634, 2147483648
  %v657 = vmul.f32 %v656, 1.442695
  %v658 = vpow.pop %v657
  %v659 = vadd.f32 %v658, 1.0
  %v660 = vrcp.pop %v659
  %v661 = vmul.f32 %v659, %v660
  %v662 = vsub.f32 1.0, %v661
  %v663 = vmul.f32 %v660, %v662
  %v664 = vadd.f32 %v660, %v663
  %vm665 = vweird.f32 %v659
  %vm666 = vweird.f32 %v660
  %vm667 = vmor %vm665, %vm666
  %v668 = vsel %vm667, %v660, %v664
  %v669 = vand.u32 2147483647, %v659
  %vm670 = vcmp.eq.f32.partialorder %v669, 8.507059e+37
  %v671 = vand.u32 %v659, 2147483648
  %v672 = vor.u32 1.1754944e-38, %v671
  %v673 = vsel %vm670, %v672, %v668
  %v674 = vmul.f32 1.0, %v673
  %676 = vrot.lane.b32.xlu0 %v574, 64
  %v677 = vpop.permute.xlu0 %676
  %v679 = vmul.f32 %v654, %v677
  %v680 = vmul.f32 %v654, %v655
  %682 = vrot.lane.b32.xlu0 %v680, 64
  %v683 = vpop.permute.xlu0 %682
  %v685 = vadd.f32 %v679, %v683
  %v686 = vtanh.pop %v685
  %v687 = vmul.f32 %v674, %v686
  %s688 = scalar_lea.vmem %s1, 24
  %v689 = vld [vmem:[%s688] sm:$0xff]
  %691 = vrot.lane.b32.xlu0 %v687, 64
  %v692 = vpop.permute.xlu0 %691
  %v694 = vmul.f32 %v689, %v692
  %v695 = vsub.f32 %v685, %v677
  %697 = vrot.lane.b32.xlu0 %v695, 64
  %v698 = vpop.permute.xlu0 %697
  %v700 = vmul.f32 %v689, %v698
  %v701 = vadd.f32 %v574, %v700
  %702 = vrot.lane.b32.xlu0 %v584, 64
  %v703 = vpop.permute.xlu0 %702
  %v705 = vsub.f32 %v687, %v703
  %707 = vrot.lane.b32.xlu0 %v705, 64
  %v708 = vpop.permute.xlu0 %707
  %v710 = vmul.f32 %v689, %v708
  %v711 = vadd.f32 %v584, %v710
  %v712 = vsel %vm200, %v589, %v586
  %v713 = vsel %vm201, %v590, %v587
  %v715 = vsel %vm226, %v711, 0
  %717 = vmatpush.msra.mxu0 0.0
  %718 = vmatpush.msra.mxu0 0.0
  %719 = vmatpush.msra.mxu0 0.0
  %720 = vmatpush.msra.mxu0 0.0
  %721 = vmatpush.msra.mxu0 0.0
  %722 = vmatpush.msra.mxu0 0.0
  %723 = vmatpush.msra.mxu0 0.0
  %724 = vmatpush.msra.mxu0 0.0
  %725 = vmatpush.msra.mxu0 %v217
  %726 = vmatpush.msra.mxu0 %v215
  %727 = vmatpush.msra.mxu0 %v213
  %728 = vmatpush.msra.mxu0 %v211
  %729 = vmatpush.msra.mxu0 %v209
  %730 = vmatpush.msra.mxu0 %v207
  %731 = vmatpush.msra.mxu0 %v205
  %732 = vmatpush.msra.mxu0 %v203
  %733 = vmatmul.f32.gmra.mxu0 %v715
  %v734 = vpop.f32.mrf.mxu0
  %v735 = vadd.f32 %v712, %v734
  %736 = vdwg.mxu0
  %737 = vmatpush.msra.mxu0 0.0
  %738 = vmatpush.msra.mxu0 0.0
  %739 = vmatpush.msra.mxu0 0.0
  %740 = vmatpush.msra.mxu0 0.0
  %741 = vmatpush.msra.mxu0 0.0
  %742 = vmatpush.msra.mxu0 0.0
  %743 = vmatpush.msra.mxu0 0.0
  %744 = vmatpush.msra.mxu0 0.0
  %745 = vmatpush.msra.mxu0 %v218
  %746 = vmatpush.msra.mxu0 %v216
  %747 = vmatpush.msra.mxu0 %v214
  %748 = vmatpush.msra.mxu0 %v212
  %749 = vmatpush.msra.mxu0 %v210
  %750 = vmatpush.msra.mxu0 %v208
  %751 = vmatpush.msra.mxu0 %v206
  %752 = vmatpush.msra.mxu0 %v204
  %753 = vmatmul.f32.gmra.mxu0 %v715
  %v754 = vpop.f32.mrf.mxu0
  %v755 = vadd.f32 %v713, %v754
  %756 = vdwg.mxu0
  %v757 = vxor.u32 %v735, 2147483648
  %v758 = vmul.f32 %v757, 1.442695
  %v759 = vpow.pop %v758
  %v760 = vadd.f32 %v759, 1.0
  %v761 = vrcp.pop %v760
  %v762 = vmul.f32 %v760, %v761
  %v763 = vsub.f32 1.0, %v762
  %v764 = vmul.f32 %v761, %v763
  %v765 = vadd.f32 %v761, %v764
  %vm766 = vweird.f32 %v760
  %vm767 = vweird.f32 %v761
  %vm768 = vmor %vm766, %vm767
  %v769 = vsel %vm768, %v761, %v765
  %v770 = vand.u32 2147483647, %v760
  %vm771 = vcmp.eq.f32.partialorder %v770, 8.507059e+37
  %v772 = vand.u32 %v760, 2147483648
  %v773 = vor.u32 1.1754944e-38, %v772
  %v774 = vsel %vm771, %v773, %v769
  %v775 = vmul.f32 1.0, %v774
  %v776 = vtanh.pop %v755
  %v777 = vxor.u32 %v755, 2147483648
  %v778 = vmul.f32 %v777, 1.442695
  %v779 = vpow.pop %v778
  %v780 = vadd.f32 %v779, 1.0
  %v781 = vrcp.pop %v780
  %v782 = vmul.f32 %v780, %v781
  %v783 = vsub.f32 1.0, %v782
  %v784 = vmul.f32 %v781, %v783
  %v785 = vadd.f32 %v781, %v784
  %vm786 = vweird.f32 %v780
  %vm787 = vweird.f32 %v781
  %vm788 = vmor %vm786, %vm787
  %v789 = vsel %vm788, %v781, %v785
  %v790 = vand.u32 2147483647, %v780
  %vm791 = vcmp.eq.f32.partialorder %v790, 8.507059e+37
  %v792 = vand.u32 %v780, 2147483648
  %v793 = vor.u32 1.1754944e-38, %v792
  %v794 = vsel %vm791, %v793, %v789
  %v795 = vmul.f32 1.0, %v794
  %797 = vrot.lane.b32.xlu0 %v701, 64
  %v798 = vpop.permute.xlu0 %797
  %v800 = vmul.f32 %v775, %v798
  %v801 = vmul.f32 %v775, %v776
  %803 = vrot.lane.b32.xlu0 %v801, 64
  %v804 = vpop.permute.xlu0 %803
  %v806 = vadd.f32 %v800, %v804
  %v807 = vtanh.pop %v806
  %v808 = vmul.f32 %v795, %v807
  %s809 = scalar_lea.vmem %s1, 32
  %v810 = vld [vmem:[%s809] sm:$0xff]
  %812 = vrot.lane.b32.xlu0 %v808, 64
  %v813 = vpop.permute.xlu0 %812
  %v815 = vmul.f32 %v810, %v813
  %v816 = vsub.f32 %v806, %v798
  %818 = vrot.lane.b32.xlu0 %v816, 64
  %v819 = vpop.permute.xlu0 %818
  %v821 = vmul.f32 %v810, %v819
  %v822 = vadd.f32 %v701, %v821
  %823 = vrot.lane.b32.xlu0 %v711, 64
  %v824 = vpop.permute.xlu0 %823
  %v826 = vsub.f32 %v808, %v824
  %828 = vrot.lane.b32.xlu0 %v826, 64
  %v829 = vpop.permute.xlu0 %828
  %v831 = vmul.f32 %v810, %v829
  %v832 = vadd.f32 %v711, %v831
  %v833 = vsel %vm200, %v462, %v459
  %v834 = vsel %vm201, %v463, %v460
  %v836 = vsel %vm226, %v832, 0
  %838 = vmatpush.msra.mxu0 0.0
  %839 = vmatpush.msra.mxu0 0.0
  %840 = vmatpush.msra.mxu0 0.0
  %841 = vmatpush.msra.mxu0 0.0
  %842 = vmatpush.msra.mxu0 0.0
  %843 = vmatpush.msra.mxu0 0.0
  %844 = vmatpush.msra.mxu0 0.0
  %845 = vmatpush.msra.mxu0 0.0
  %846 = vmatpush.msra.mxu0 %v217
  %847 = vmatpush.msra.mxu0 %v215
  %848 = vmatpush.msra.mxu0 %v213
  %849 = vmatpush.msra.mxu0 %v211
  %850 = vmatpush.msra.mxu0 %v209
  %851 = vmatpush.msra.mxu0 %v207
  %852 = vmatpush.msra.mxu0 %v205
  %853 = vmatpush.msra.mxu0 %v203
  %854 = vmatmul.f32.gmra.mxu0 %v836
  %v855 = vpop.f32.mrf.mxu0
  %v856 = vadd.f32 %v833, %v855
  %857 = vdwg.mxu0
  %858 = vmatpush.msra.mxu0 0.0
  %859 = vmatpush.msra.mxu0 0.0
  %860 = vmatpush.msra.mxu0 0.0
  %861 = vmatpush.msra.mxu0 0.0
  %862 = vmatpush.msra.mxu0 0.0
  %863 = vmatpush.msra.mxu0 0.0
  %864 = vmatpush.msra.mxu0 0.0
  %865 = vmatpush.msra.mxu0 0.0
  %866 = vmatpush.msra.mxu0 %v218
  %867 = vmatpush.msra.mxu0 %v216
  %868 = vmatpush.msra.mxu0 %v214
  %869 = vmatpush.msra.mxu0 %v212
  %870 = vmatpush.msra.mxu0 %v210
  %871 = vmatpush.msra.mxu0 %v208
  %872 = vmatpush.msra.mxu0 %v206
  %873 = vmatpush.msra.mxu0 %v204
  %874 = vmatmul.f32.gmra.mxu0 %v836
  %v875 = vpop.f32.mrf.mxu0
  %v876 = vadd.f32 %v834, %v875
  %877 = vdwg.mxu0
  %v878 = vxor.u32 %v856, 2147483648
  %v879 = vmul.f32 %v878, 1.442695
  %v880 = vpow.pop %v879
  %v881 = vadd.f32 %v880, 1.0
  %v882 = vrcp.pop %v881
  %v883 = vmul.f32 %v881, %v882
  %v884 = vsub.f32 1.0, %v883
  %v885 = vmul.f32 %v882, %v884
  %v886 = vadd.f32 %v882, %v885
  %vm887 = vweird.f32 %v881
  %vm888 = vweird.f32 %v882
  %vm889 = vmor %vm887, %vm888
  %v890 = vsel %vm889, %v882, %v886
  %v891 = vand.u32 2147483647, %v881
  %vm892 = vcmp.eq.f32.partialorder %v891, 8.507059e+37
  %v893 = vand.u32 %v881, 2147483648
  %v894 = vor.u32 1.1754944e-38, %v893
  %v895 = vsel %vm892, %v894, %v890
  %v896 = vmul.f32 1.0, %v895
  %v897 = vtanh.pop %v876
  %v898 = vxor.u32 %v876, 2147483648
  %v899 = vmul.f32 %v898, 1.442695
  %v900 = vpow.pop %v899
  %v901 = vadd.f32 %v900, 1.0
  %v902 = vrcp.pop %v901
  %v903 = vmul.f32 %v901, %v902
  %v904 = vsub.f32 1.0, %v903
  %v905 = vmul.f32 %v902, %v904
  %v906 = vadd.f32 %v902, %v905
  %vm907 = vweird.f32 %v901
  %vm908 = vweird.f32 %v902
  %vm909 = vmor %vm907, %vm908
  %v910 = vsel %vm909, %v902, %v906
  %v911 = vand.u32 2147483647, %v901
  %vm912 = vcmp.eq.f32.partialorder %v911, 8.507059e+37
  %v913 = vand.u32 %v901, 2147483648
  %v914 = vor.u32 1.1754944e-38, %v913
  %v915 = vsel %vm912, %v914, %v910
  %v916 = vmul.f32 1.0, %v915
  %918 = vrot.lane.b32.xlu0 %v822, 64
  %v919 = vpop.permute.xlu0 %918
  %v921 = vmul.f32 %v896, %v919
  %v922 = vmul.f32 %v896, %v897
  %924 = vrot.lane.b32.xlu0 %v922, 64
  %v925 = vpop.permute.xlu0 %924
  %v927 = vadd.f32 %v921, %v925
  %v928 = vtanh.pop %v927
  %v929 = vmul.f32 %v916, %v928
  %s930 = scalar_lea.vmem %s1, 40
  %v931 = vld [vmem:[%s930] sm:$0xff]
  %933 = vrot.lane.b32.xlu0 %v929, 64
  %v934 = vpop.permute.xlu0 %933
  %v936 = vmul.f32 %v931, %v934
  %v937 = vsub.f32 %v927, %v919
  %939 = vrot.lane.b32.xlu0 %v937, 64
  %v940 = vpop.permute.xlu0 %939
  %v942 = vmul.f32 %v931, %v940
  %v943 = vadd.f32 %v822, %v942
  %944 = vrot.lane.b32.xlu0 %v832, 64
  %v945 = vpop.permute.xlu0 %944
  %v947 = vsub.f32 %v929, %v945
  %949 = vrot.lane.b32.xlu0 %v947, 64
  %v950 = vpop.permute.xlu0 %949
  %v952 = vmul.f32 %v931, %v950
  %v953 = vadd.f32 %v832, %v952
  %v954 = vsel %vm200, %v335, %v332
  %v955 = vsel %vm201, %v336, %v333
  %v957 = vsel %vm226, %v953, 0
  %959 = vmatpush.msra.mxu0 0.0
  %960 = vmatpush.msra.mxu0 0.0
  %961 = vmatpush.msra.mxu0 0.0
  %962 = vmatpush.msra.mxu0 0.0
  %963 = vmatpush.msra.mxu0 0.0
  %964 = vmatpush.msra.mxu0 0.0
  %965 = vmatpush.msra.mxu0 0.0
  %966 = vmatpush.msra.mxu0 0.0
  %967 = vmatpush.msra.mxu0 %v217
  %968 = vmatpush.msra.mxu0 %v215
  %969 = vmatpush.msra.mxu0 %v213
  %970 = vmatpush.msra.mxu0 %v211
  %971 = vmatpush.msra.mxu0 %v209
  %972 = vmatpush.msra.mxu0 %v207
  %973 = vmatpush.msra.mxu0 %v205
  %974 = vmatpush.msra.mxu0 %v203
  %975 = vmatmul.f32.gmra.mxu0 %v957
  %v976 = vpop.f32.mrf.mxu0
  %v977 = vadd.f32 %v954, %v976
  %978 = vdwg.mxu0
  %979 = vmatpush.msra.mxu0 0.0
  %980 = vmatpush.msra.mxu0 0.0
  %981 = vmatpush.msra.mxu0 0.0
  %982 = vmatpush.msra.mxu0 0.0
  %983 = vmatpush.msra.mxu0 0.0
  %984 = vmatpush.msra.mxu0 0.0
  %985 = vmatpush.msra.mxu0 0.0
  %986 = vmatpush.msra.mxu0 0.0
  %987 = vmatpush.msra.mxu0 %v218
  %988 = vmatpush.msra.mxu0 %v216
  %989 = vmatpush.msra.mxu0 %v214
  %990 = vmatpush.msra.mxu0 %v212
  %991 = vmatpush.msra.mxu0 %v210
  %992 = vmatpush.msra.mxu0 %v208
  %993 = vmatpush.msra.mxu0 %v206
  %994 = vmatpush.msra.mxu0 %v204
  %995 = vmatmul.f32.gmra.mxu0 %v957
  %v996 = vpop.f32.mrf.mxu0
  %v997 = vadd.f32 %v955, %v996
  %998 = vdwg.mxu0
  %v999 = vxor.u32 %v977, 2147483648
  %v1000 = vmul.f32 %v999, 1.442695
  %v1001 = vpow.pop %v1000
  %v1002 = vadd.f32 %v1001, 1.0
  %v1003 = vrcp.pop %v1002
  %v1004 = vmul.f32 %v1002, %v1003
  %v1005 = vsub.f32 1.0, %v1004
  %v1006 = vmul.f32 %v1003, %v1005
  %v1007 = vadd.f32 %v1003, %v1006
  %vm1008 = vweird.f32 %v1002
  %vm1009 = vweird.f32 %v1003
  %vm1010 = vmor %vm1008, %vm1009
  %v1011 = vsel %vm1010, %v1003, %v1007
  %v1012 = vand.u32 2147483647, %v1002
  %vm1013 = vcmp.eq.f32.partialorder %v1012, 8.507059e+37
  %v1014 = vand.u32 %v1002, 2147483648
  %v1015 = vor.u32 1.1754944e-38, %v1014
  %v1016 = vsel %vm1013, %v1015, %v1011
  %v1017 = vmul.f32 1.0, %v1016
  %v1018 = vtanh.pop %v997
  %v1019 = vxor.u32 %v997, 2147483648
  %v1020 = vmul.f32 %v1019, 1.442695
  %v1021 = vpow.pop %v1020
  %v1022 = vadd.f32 %v1021, 1.0
  %v1023 = vrcp.pop %v1022
  %v1024 = vmul.f32 %v1022, %v1023
  %v1025 = vsub.f32 1.0, %v1024
  %v1026 = vmul.f32 %v1023, %v1025
  %v1027 = vadd.f32 %v1023, %v1026
  %vm1028 = vweird.f32 %v1022
  %vm1029 = vweird.f32 %v1023
  %vm1030 = vmor %vm1028, %vm1029
  %v1031 = vsel %vm1030, %v1023, %v1027
  %v1032 = vand.u32 2147483647, %v1022
  %vm1033 = vcmp.eq.f32.partialorder %v1032, 8.507059e+37
  %v1034 = vand.u32 %v1022, 2147483648
  %v1035 = vor.u32 1.1754944e-38, %v1034
  %v1036 = vsel %vm1033, %v1035, %v1031
  %v1037 = vmul.f32 1.0, %v1036
  %1039 = vrot.lane.b32.xlu0 %v943, 64
  %v1040 = vpop.permute.xlu0 %1039
  %v1042 = vmul.f32 %v1017, %v1040
  %v1043 = vmul.f32 %v1017, %v1018
  %1045 = vrot.lane.b32.xlu0 %v1043, 64
  %v1046 = vpop.permute.xlu0 %1045
  %v1048 = vadd.f32 %v1042, %v1046
  %v1049 = vtanh.pop %v1048
  %v1050 = vmul.f32 %v1037, %v1049
  %s1051 = scalar_lea.vmem %s1, 48
  %v1052 = vld [vmem:[%s1051] sm:$0xff]
  %1054 = vrot.lane.b32.xlu0 %v1050, 64
  %v1055 = vpop.permute.xlu0 %1054
  %v1057 = vmul.f32 %v1052, %v1055
  %v1058 = vsub.f32 %v1048, %v1040
  %1060 = vrot.lane.b32.xlu0 %v1058, 64
  %v1061 = vpop.permute.xlu0 %1060
  %v1063 = vmul.f32 %v1052, %v1061
  %v1064 = vadd.f32 %v943, %v1063
  %1065 = vrot.lane.b32.xlu0 %v953, 64
  %v1066 = vpop.permute.xlu0 %1065
  %v1068 = vsub.f32 %v1050, %v1066
  %1070 = vrot.lane.b32.xlu0 %v1068, 64
  %v1071 = vpop.permute.xlu0 %1070
  %v1073 = vmul.f32 %v1052, %v1071
  %v1074 = vadd.f32 %v953, %v1073
  %v1075 = vsel %vm200, %v222, %v219
  %v1076 = vsel %vm201, %v223, %v220
  %v1078 = vsel %vm226, %v1074, 0
  %1080 = vmatpush.msra.mxu0 0.0
  %1081 = vmatpush.msra.mxu0 0.0
  %1082 = vmatpush.msra.mxu0 0.0
  %1083 = vmatpush.msra.mxu0 0.0
  %1084 = vmatpush.msra.mxu0 0.0
  %1085 = vmatpush.msra.mxu0 0.0
  %1086 = vmatpush.msra.mxu0 0.0
  %1087 = vmatpush.msra.mxu0 0.0
  %1088 = vmatpush.msra.mxu0 %v217
  %1089 = vmatpush.msra.mxu0 %v215
  %1090 = vmatpush.msra.mxu0 %v213
  %1091 = vmatpush.msra.mxu0 %v211
  %1092 = vmatpush.msra.mxu0 %v209
  %1093 = vmatpush.msra.mxu0 %v207
  %1094 = vmatpush.msra.mxu0 %v205
  %1095 = vmatpush.msra.mxu0 %v203
  %1096 = vmatmul.f32.gmra.mxu0 %v1078
  %v1097 = vpop.f32.mrf.mxu0
  %v1098 = vadd.f32 %v1075, %v1097
  %1099 = vdwg.mxu0
  %1100 = vmatpush.msra.mxu0 0.0
  %1101 = vmatpush.msra.mxu0 0.0
  %1102 = vmatpush.msra.mxu0 0.0
  %1103 = vmatpush.msra.mxu0 0.0
  %1104 = vmatpush.msra.mxu0 0.0
  %1105 = vmatpush.msra.mxu0 0.0
  %1106 = vmatpush.msra.mxu0 0.0
  %1107 = vmatpush.msra.mxu0 0.0
  %1108 = vmatpush.msra.mxu0 %v218
  %1109 = vmatpush.msra.mxu0 %v216
  %1110 = vmatpush.msra.mxu0 %v214
  %1111 = vmatpush.msra.mxu0 %v212
  %1112 = vmatpush.msra.mxu0 %v210
  %1113 = vmatpush.msra.mxu0 %v208
  %1114 = vmatpush.msra.mxu0 %v206
  %1115 = vmatpush.msra.mxu0 %v204
  %1116 = vmatmul.f32.gmra.mxu0 %v1078
  %v1117 = vpop.f32.mrf.mxu0
  %v1118 = vadd.f32 %v1076, %v1117
  %1119 = vdwg.mxu0
  %v1120 = vxor.u32 %v1098, 2147483648
  %v1121 = vmul.f32 %v1120, 1.442695
  %v1122 = vpow.pop %v1121
  %v1123 = vadd.f32 %v1122, 1.0
  %v1124 = vrcp.pop %v1123
  %v1125 = vmul.f32 %v1123, %v1124
  %v1126 = vsub.f32 1.0, %v1125
  %v1127 = vmul.f32 %v1124, %v1126
  %v1128 = vadd.f32 %v1124, %v1127
  %vm1129 = vweird.f32 %v1123
  %vm1130 = vweird.f32 %v1124
  %vm1131 = vmor %vm1129, %vm1130
  %v1132 = vsel %vm1131, %v1124, %v1128
  %v1133 = vand.u32 2147483647, %v1123
  %vm1134 = vcmp.eq.f32.partialorder %v1133, 8.507059e+37
  %v1135 = vand.u32 %v1123, 2147483648
  %v1136 = vor.u32 1.1754944e-38, %v1135
  %v1137 = vsel %vm1134, %v1136, %v1132
  %v1138 = vmul.f32 1.0, %v1137
  %v1139 = vtanh.pop %v1118
  %v1140 = vxor.u32 %v1118, 2147483648
  %v1141 = vmul.f32 %v1140, 1.442695
  %v1142 = vpow.pop %v1141
  %v1143 = vadd.f32 %v1142, 1.0
  %v1144 = vrcp.pop %v1143
  %v1145 = vmul.f32 %v1143, %v1144
  %v1146 = vsub.f32 1.0, %v1145
  %v1147 = vmul.f32 %v1144, %v1146
  %v1148 = vadd.f32 %v1144, %v1147
  %vm1149 = vweird.f32 %v1143
  %vm1150 = vweird.f32 %v1144
  %vm1151 = vmor %vm1149, %vm1150
  %v1152 = vsel %vm1151, %v1144, %v1148
  %v1153 = vand.u32 2147483647, %v1143
  %vm1154 = vcmp.eq.f32.partialorder %v1153, 8.507059e+37
  %v1155 = vand.u32 %v1143, 2147483648
  %v1156 = vor.u32 1.1754944e-38, %v1155
  %v1157 = vsel %vm1154, %v1156, %v1152
  %v1158 = vmul.f32 1.0, %v1157
  %1160 = vrot.lane.b32.xlu0 %v1064, 64
  %v1161 = vpop.permute.xlu0 %1160
  %v1163 = vmul.f32 %v1138, %v1161
  %v1164 = vmul.f32 %v1138, %v1139
  %1166 = vrot.lane.b32.xlu0 %v1164, 64
  %v1167 = vpop.permute.xlu0 %1166
  %v1169 = vadd.f32 %v1163, %v1167
  %v1170 = vtanh.pop %v1169
  %v1171 = vmul.f32 %v1158, %v1170
  %s1172 = scalar_lea.vmem %s1, 56
  %v1173 = vld [vmem:[%s1172] sm:$0xff]
  %1175 = vrot.lane.b32.xlu0 %v1171, 64
  %v1176 = vpop.permute.xlu0 %1175
  %v1178 = vmul.f32 %v1173, %v1176
  %1179 = vrot.lane.b32.xlu0 %v1074, 64
  %v1180 = vpop.permute.xlu0 %1179
  %v1182 = vsub.f32 %v1171, %v1180
  %1184 = vrot.lane.b32.xlu0 %v1182, 64
  %v1185 = vpop.permute.xlu0 %1184
  %v1187 = vmul.f32 %v1173, %v1185
  %v1188 = vadd.f32 %v1074, %v1187
  %v1189 = vsel %vm202, %v323, %v1178
  %1190 = vst.msk [vmem:[%s7] sm:$0xff] %vm226, %v1189
  %v1191 = vsel %vm202, %v440, %v1057
  %s1192 = scalar_lea.vmem %s7, 8
  %1193 = vst.msk [vmem:[%s1192] sm:$0xff] %vm226, %v1191
  %v1194 = vsel %vm202, %v567, %v936
  %s1195 = scalar_lea.vmem %s7, 16
  %1196 = vst.msk [vmem:[%s1195] sm:$0xff] %vm226, %v1194
  %v1197 = vsel %vm202, %v694, %v815
  %s1198 = scalar_lea.vmem %s7, 24
  %1199 = vst.msk [vmem:[%s1198] sm:$0xff] %vm226, %v1197
  %v1200 = vsel %vm202, %v815, %v694
  %s1201 = scalar_lea.vmem %s7, 32
  %1202 = vst.msk [vmem:[%s1201] sm:$0xff] %vm226, %v1200
  %v1203 = vsel %vm202, %v936, %v567
  %s1204 = scalar_lea.vmem %s7, 40
  %1205 = vst.msk [vmem:[%s1204] sm:$0xff] %vm226, %v1203
  %v1206 = vsel %vm202, %v1057, %v440
  %s1207 = scalar_lea.vmem %s7, 48
  %1208 = vst.msk [vmem:[%s1207] sm:$0xff] %vm226, %v1206
  %v1209 = vsel %vm202, %v1178, %v323
  %s1210 = scalar_lea.vmem %s7, 56
  %1211 = vst.msk [vmem:[%s1210] sm:$0xff] %vm226, %v1209
  %v1212 = vld [vmem:[%s5] sm:$0xff]
  %v1213 = vld [vmem:[%s5 + $0x8] sm:$0xff]
  %v1214 = vld [vmem:[%s5 + $0x10] sm:$0xff]
  %v1215 = vld [vmem:[%s5 + $0x18] sm:$0xff]
  %v1216 = vld [vmem:[%s5 + $0x20] sm:$0xff]
  %v1217 = vld [vmem:[%s5 + $0x28] sm:$0xff]
  %v1218 = vld [vmem:[%s5 + $0x30] sm:$0xff]
  %v1219 = vld [vmem:[%s5 + $0x38] sm:$0xff]
  %v1220 = vld [vmem:[%s6] sm:$0x1]
  %v1222 = vperm.slane %v1220, 0
  %v1225 = vsel %vm226, %v1188, 0
  %1227 = vmatpush.msra.mxu0 0.0
  %1228 = vmatpush.msra.mxu0 0.0
  %1229 = vmatpush.msra.mxu0 0.0
  %1230 = vmatpush.msra.mxu0 0.0
  %1231 = vmatpush.msra.mxu0 0.0
  %1232 = vmatpush.msra.mxu0 0.0
  %1233 = vmatpush.msra.mxu0 0.0
  %1234 = vmatpush.msra.mxu0 0.0
  %1235 = vmatpush.msra.mxu0 %v1219
  %1236 = vmatpush.msra.mxu0 %v1218
  %1237 = vmatpush.msra.mxu0 %v1217
  %1238 = vmatpush.msra.mxu0 %v1216
  %1239 = vmatpush.msra.mxu0 %v1215
  %1240 = vmatpush.msra.mxu0 %v1214
  %1241 = vmatpush.msra.mxu0 %v1213
  %1242 = vmatpush.msra.mxu0 %v1212
  %1243 = vmatmul.f32.gmra.mxu0 %v1225
  %v1244 = vpop.f32.mrf.mxu0
  %v1245 = vadd.f32 %v1222, %v1244
  %1246 = vdwg.mxu0
  %vm1247 = vcmask 130048
  %1248 = vst.msk [vmem:[%s8] sm:$0xff] %vm1247, %v1245
  // Predicated region
  $region30: #{basic_encoder_forward.1} parent=0 // pred_check
    _
  $region31: #{basic_encoder_forward.1} parent=0 // pred_check_branch
    %1250 = sbr.rel (0) target = $region33
  $region32: #{basic_encoder_forward.1} parent=0 // pred_region
    _
  $region33: #{basic_encoder_forward.1} parent=0 // pred_fallthru
    _
  // Predicated region
  $region34: #{basic_encoder_forward.1} parent=0 // pred_check
    _
  $region35: #{basic_encoder_forward.1} parent=0 // pred_check_branch
    %1252 = sbr.rel (0) target = $region37
  $region36: #{basic_encoder_forward.1} parent=0 // pred_region
    _
  $region37: #{basic_encoder_forward.1} parent=0 // pred_fallthru
    _
  // Predicated region
  $region38: #{basic_encoder_forward.1} parent=0 // pred_check
    _
  $region39: #{basic_encoder_forward.1} parent=0 // pred_check_branch
    %1254 = sbr.rel (0) target = $region41
  $region40: #{basic_encoder_forward.1} parent=0 // pred_region
    _
  $region41: #{basic_encoder_forward.1} parent=0 // pred_fallthru
    _
  // Predicated region
  $region42: #{basic_encoder_forward.1} parent=0 // pred_check
    _
  $region43: #{basic_encoder_forward.1} parent=0 // pred_check_branch
    %1256 = sbr.rel (0) target = $region45
  $region44: #{basic_encoder_forward.1} parent=0 // pred_region
    _
  $region45: #{basic_encoder_forward.1} parent=0 // pred_fallthru
    _

</llo_original>
